<compile_context>
chip_gen: v7x
topology: tpu7x:2x2x1
jax: 0.10.0
libtpu: 0.0.40
codegen_flags: <defaults>
</compile_context>

<pallas_src>
import functools

import jax
import jax.numpy as jnp
from jax.experimental import pallas as pl
from jax.experimental.pallas import tpu as pltpu


def _default_vmem_limit_bytes():
    # ~75% of physical per-core VMEM, capped; leaves headroom for double
    # buffers, compiler internal scratch and semaphores on every chip.
    try:
        phys = pltpu.get_tpu_info().vmem_capacity_bytes
    except Exception:
        phys = 64 * 1024 * 1024          # conservative (v7x physical)
    return max(32 * 1024 * 1024, min(int(phys * 3 // 4), 112 * 1024 * 1024))


def _mhsa_kernel(x_ref, wq_ref, bq_ref, wk_ref, bk_ref, wv_ref, bv_ref,
                 wo_ref, bo_ref, o_ref, k_scr, v_scr, o_scr,
                 *, num_heads: int, scale: float, seq_len: int):
    qi = pl.program_id(1)
    l_pad, d = x_ref.shape               # x block: (L_pad, D), activation dtype
    tq = o_ref.shape[0]
    hd = d // num_heads
    cdtype = x_ref.dtype                 # MXU input dtype (bf16 or f32)

    # ---- K/V projection: once per batch element, head-major into VMEM ------
    @pl.when(qi == 0)
    def _():
        xkv = x_ref[...]                                        # (L_pad, D)
        for h in range(num_heads):                              # unrolled
            k_h = jnp.dot(xkv, wk_ref[h],
                          preferred_element_type=jnp.float32)   # (L_pad, hd)
            k_scr[h] = (k_h + bk_ref[h].astype(jnp.float32)).astype(cdtype)
            v_h = jnp.dot(xkv, wv_ref[h],
                          preferred_element_type=jnp.float32)
            v_scr[h] = (v_h + bv_ref[h].astype(jnp.float32)).astype(cdtype)

    # ---- query block: sublane slice of the resident x block ----------------
    q_start = pl.multiple_of(qi * tq, tq)
    xq = x_ref[pl.ds(q_start, tq), :]                           # (TQ, D)

    # ---- per-head attention; head outputs written into a (TQ, D) scratch ---
    for h in range(num_heads):                                  # unrolled
        q_h = jnp.dot(xq, wq_ref[h],
                      preferred_element_type=jnp.float32)       # (TQ, hd) f32
        q_h = ((q_h + bq_ref[h].astype(jnp.float32)) * scale).astype(cdtype)

        k_h = k_scr[h]                                          # (L_pad, hd)
        # q_h @ k_h^T without an explicit transpose.
        s = jax.lax.dot_general(q_h, k_h, (((1,), (1,)), ((), ())),
                                preferred_element_type=jnp.float32)  # (TQ,L_pad)
        if l_pad != seq_len:             # static: only when L was padded
            col = jax.lax.broadcasted_iota(jnp.int32, s.shape, 1)
            s = jnp.where(col < seq_len, s, jnp.float32(-1e30))

        m = jnp.max(s, axis=-1, keepdims=True)
        p = jnp.exp(s - m)                                      # unnormalized
        denom = jnp.sum(p, axis=-1, keepdims=True)

        o_h = jnp.dot(p.astype(cdtype), v_scr[h],
                      preferred_element_type=jnp.float32)       # (TQ, hd) f32
        # Normalize after PV: (TQ, hd) VALU op instead of (TQ, L).
        o_h = o_h * pl.reciprocal(denom, approx=True)
        o_scr[:, h * hd:(h + 1) * hd] = o_h

    # ---- single full-fill out-projection matmul -----------------------------
    out = jnp.dot(o_scr[...].astype(cdtype), wo_ref[...],
                  preferred_element_type=jnp.float32)           # (TQ, D)
    out = out + bo_ref[...].astype(jnp.float32)
    o_ref[...] = out.astype(o_ref.dtype)


def multi_head_self_attention(x, qkv_w, qkv_b, out_w, out_b, num_heads,
                              *, q_block=256):
    """Forward pass of the PyTorch MultiHeadSelfAttention module.

    x      : (B, L, D)
    qkv_w  : (3D, D)   nn.Linear weight (out, in)
    qkv_b  : (3D,)
    out_w  : (D, D)
    out_b  : (D,)
    """
    B, L, D = x.shape
    assert D % num_heads == 0
    hd = D // num_heads
    scale = 1.0 / (D ** 0.5)             # module uses 1/sqrt(D), not 1/sqrt(hd)

    # Query-block tiling; pad L to a multiple of the block (masked in-kernel).
    tq = min(q_block, L)
    nq = pl.cdiv(L, tq)
    l_pad = nq * tq
    x_in = x if l_pad == L else jnp.pad(x, ((0, 0), (0, l_pad - L), (0, 0)))

    # nn.Linear weights (out, in) -> (in, out); head-major per-head blocks.
    w_t = qkv_w.T                                              # (D, 3D)
    wq = w_t[:, :D].reshape(D, num_heads, hd).transpose(1, 0, 2)       # (H,D,hd)
    wk = w_t[:, D:2 * D].reshape(D, num_heads, hd).transpose(1, 0, 2)  # (H,D,hd)
    wv = w_t[:, 2 * D:].reshape(D, num_heads, hd).transpose(1, 0, 2)   # (H,D,hd)
    bq = qkv_b[:D].reshape(num_heads, 1, hd)
    bk = qkv_b[D:2 * D].reshape(num_heads, 1, hd)
    bv = qkv_b[2 * D:].reshape(num_heads, 1, hd)
    wo = out_w.T                                               # (D, D)
    bo = out_b.reshape(1, D)

    def const(shape):
        # Constant index map: DMA'd once, stays resident in VMEM.
        return pl.BlockSpec(shape, lambda b, qi: (0,) * len(shape))

    kernel = functools.partial(_mhsa_kernel, num_heads=num_heads,
                               scale=scale, seq_len=L)

    out = pl.pallas_call(
        kernel,
        out_shape=jax.ShapeDtypeStruct((B, l_pad, D), x.dtype),
        grid_spec=pltpu.PrefetchScalarGridSpec(
            num_scalar_prefetch=0,
            grid=(B, nq),
            in_specs=[
                # Single x block serves both the query slice and the K/V source.
                pl.BlockSpec((None, l_pad, D), lambda b, qi: (b, 0, 0)),
                const((num_heads, D, hd)),        # Wq (head-major, resident)
                const((num_heads, 1, hd)),        # bq
                const((num_heads, D, hd)),        # Wk
                const((num_heads, 1, hd)),        # bk
                const((num_heads, D, hd)),        # Wv
                const((num_heads, 1, hd)),        # bv
                const((D, D)),                    # Wo
                const((1, D)),                    # bo
            ],
            out_specs=pl.BlockSpec((None, tq, D), lambda b, qi: (b, qi, 0)),
            scratch_shapes=[
                pltpu.VMEM((num_heads, l_pad, hd), x.dtype),   # K (per batch)
                pltpu.VMEM((num_heads, l_pad, hd), x.dtype),   # V (per batch)
                pltpu.VMEM((tq, D), jnp.float32),              # head outputs
            ],
        ),
        compiler_params=pltpu.CompilerParams(
            # qi must be "arbitrary": K/V scratch persists across query blocks.
            dimension_semantics=("parallel", "arbitrary"),
            vmem_limit_bytes=_default_vmem_limit_bytes(),
        ),
    )(x_in, wq, bq, wk, bk, wv, bv, wo, bo)

    return out if l_pad == L else out[:, :L, :]


# ---------------- pure-JAX reference (mirrors the PyTorch forward) -----------
def reference(x, qkv_w, qkv_b, out_w, out_b, num_heads):
    B, L, D = x.shape
    hd = D // num_heads
    scale = 1.0 / (D ** 0.5)
    qkv = x @ qkv_w.T + qkv_b                       # (B, L, 3D)
    qkv = qkv.reshape(B, L, 3, num_heads, hd)
    q, k, v = qkv[:, :, 0], qkv[:, :, 1], qkv[:, :, 2]
    q = jnp.transpose(q, (0, 2, 1, 3))
    k = jnp.transpose(k, (0, 2, 1, 3))
    v = jnp.transpose(v, (0, 2, 1, 3))
    s = jnp.einsum("bhqd,bhkd->bhqk", q, k) * scale
    p = jax.nn.softmax(s, axis=-1)
    o = jnp.einsum("bhqk,bhkd->bhqd", p, v)
    o = jnp.transpose(o, (0, 2, 1, 3)).reshape(B, L, D)
    return o @ out_w.T + out_b


if __name__ == "__main__":
    num_heads = 4
    key = jax.random.PRNGKey(0)

    def make_inputs(B, L, D):
        ks = jax.random.split(key, 5)
        wscale = 0.05
        x = jax.random.normal(ks[0], (B, L, D), jnp.float32)
        qkv_w = jax.random.normal(ks[1], (3 * D, D), jnp.float32) * wscale
        qkv_b = jax.random.normal(ks[2], (3 * D,), jnp.float32) * wscale
        out_w = jax.random.normal(ks[3], (D, D), jnp.float32) * wscale
        out_b = jax.random.normal(ks[4], (D,), jnp.float32) * wscale
        return x, qkv_w, qkv_b, out_w, out_b

    # --- test 1: single query block (L <= q_block), f32 ---------------------
    B, L, D = 2, 8, 32
    x, qkv_w, qkv_b, out_w, out_b = make_inputs(B, L, D)
    out = multi_head_self_attention(x, qkv_w, qkv_b, out_w, out_b, num_heads)
    out = jax.block_until_ready(out)
    ref = reference(x, qkv_w, qkv_b, out_w, out_b, num_heads)
    assert out.shape == (B, L, D)
    err = jnp.max(jnp.abs(out - ref))
    assert jnp.allclose(out, ref, atol=2e-3, rtol=2e-3), f"max abs err {err}"

    # --- test 2: multiple query blocks + padded/masked L (exercises the
    #             persistent K/V scratch across qi and the padding mask) -----
    B2, L2, D2 = 2, 12, 32
    x2, qkv_w2, qkv_b2, out_w2, out_b2 = make_inputs(B2, L2, D2)
    out2 = multi_head_self_attention(x2, qkv_w2, qkv_b2, out_w2, out_b2,
                                     num_heads, q_block=8)
    out2 = jax.block_until_ready(out2)
    ref2 = reference(x2, qkv_w2, qkv_b2, out_w2, out_b2, num_heads)
    assert out2.shape == (B2, L2, D2)
    err2 = jnp.max(jnp.abs(out2 - ref2))
    assert jnp.allclose(out2, ref2, atol=2e-3, rtol=2e-3), f"max abs err {err2}"

    # --- test 3: bf16 smoke run (bf16 MXU path; no strict tolerance) --------
    out_bf16 = multi_head_self_attention(
        x.astype(jnp.bfloat16),
        qkv_w.astype(jnp.bfloat16), qkv_b.astype(jnp.bfloat16),
        out_w.astype(jnp.bfloat16), out_b.astype(jnp.bfloat16),
        num_heads)
    out_bf16 = jax.block_until_ready(out_bf16)
    assert out_bf16.shape == (B, L, D)
    assert bool(jnp.all(jnp.isfinite(out_bf16.astype(jnp.float32))))

    print("KERNEL_OK")
</pallas_src>

<mosaic_0001>
module attributes {stable_mosaic.version = 11 : i64} {
  func.func @_mhsa_kernel(%arg0: i32, %arg1: i32, %arg2: memref<1x8x32xf32, #tpu.memory_space<vmem>>, %arg3: memref<4x32x8xf32, #tpu.memory_space<vmem>>, %arg4: memref<4x1x8xf32, #tpu.memory_space<vmem>>, %arg5: memref<4x32x8xf32, #tpu.memory_space<vmem>>, %arg6: memref<4x1x8xf32, #tpu.memory_space<vmem>>, %arg7: memref<4x32x8xf32, #tpu.memory_space<vmem>>, %arg8: memref<4x1x8xf32, #tpu.memory_space<vmem>>, %arg9: memref<32x32xf32, #tpu.memory_space<vmem>>, %arg10: memref<1x32xf32, #tpu.memory_space<vmem>>, %arg11: memref<1x8x32xf32, #tpu.memory_space<vmem>>, %arg12: memref<4x8x8xf32, #tpu.memory_space<vmem>>, %arg13: memref<4x8x8xf32, #tpu.memory_space<vmem>>, %arg14: memref<8x32xf32, #tpu.memory_space<vmem>>) attributes {dimension_semantics = [#tpu.dimension_semantics<parallel>, #tpu.dimension_semantics<arbitrary>], iteration_bounds = array<i64: 2, 1>, scalar_prefetch = 0 : i64, scratch_operands = 3 : i64, tpu.core_type = #tpu.core_type<tc>, window_params = [{transform_indices = @transform_0, window_bounds = array<i64: 1, 8, 32>}, {pipeline_mode = #tpu.pipeline_mode<synchronous>, transform_indices = @transform_1, window_bounds = array<i64: 4, 32, 8>}, {pipeline_mode = #tpu.pipeline_mode<synchronous>, transform_indices = @transform_2, window_bounds = array<i64: 4, 1, 8>}, {pipeline_mode = #tpu.pipeline_mode<synchronous>, transform_indices = @transform_3, window_bounds = array<i64: 4, 32, 8>}, {pipeline_mode = #tpu.pipeline_mode<synchronous>, transform_indices = @transform_4, window_bounds = array<i64: 4, 1, 8>}, {pipeline_mode = #tpu.pipeline_mode<synchronous>, transform_indices = @transform_5, window_bounds = array<i64: 4, 32, 8>}, {pipeline_mode = #tpu.pipeline_mode<synchronous>, transform_indices = @transform_6, window_bounds = array<i64: 4, 1, 8>}, {pipeline_mode = #tpu.pipeline_mode<synchronous>, transform_indices = @transform_7, window_bounds = array<i64: 32, 32>}, {pipeline_mode = #tpu.pipeline_mode<synchronous>, transform_indices = @transform_8, window_bounds = array<i64: 1, 32>}, {transform_indices = @transform_9, window_bounds = array<i64: 1, 8, 32>}]} {
    %c0_i32 = arith.constant 0 : i32
    %0 = arith.cmpi eq, %arg1, %c0_i32 : i32
    %1 = arith.extui %0 : i1 to i32
    %c0_i32_0 = arith.constant 0 : i32
    %2 = arith.cmpi ne, %1, %c0_i32_0 : i32
    scf.if %2 {
      %c0_85 = arith.constant 0 : index
      %c0_86 = arith.constant 0 : index
      %c0_87 = arith.constant 0 : index
      %121 = vector.load %arg2[%c0_85, %c0_86, %c0_87] : memref<1x8x32xf32, #tpu.memory_space<vmem>>, vector<1x8x32xf32>
      %122 = vector.shape_cast %121 : vector<1x8x32xf32> to vector<8x32xf32>
      %c0_88 = arith.constant 0 : index
      %c0_89 = arith.constant 0 : index
      %c0_90 = arith.constant 0 : index
      %123 = vector.load %arg5[%c0_88, %c0_89, %c0_90] : memref<4x32x8xf32, #tpu.memory_space<vmem>>, vector<1x32x8xf32>
      %124 = vector.shape_cast %123 : vector<1x32x8xf32> to vector<32x8xf32>
      %cst_91 = arith.constant dense<0.000000e+00> : vector<8x8xf32>
      %125 = tpu.matmul %122, %124, %cst_91 {dimension_numbers = #tpu.dot_dimension_numbers<[1], [0], [0], [1], [0, 0, 1, 1], [], []>} : vector<8x32xf32>, vector<32x8xf32>, vector<8x8xf32> -> vector<8x8xf32>
      %c0_92 = arith.constant 0 : index
      %c0_93 = arith.constant 0 : index
      %c0_94 = arith.constant 0 : index
      %126 = vector.load %arg6[%c0_92, %c0_93, %c0_94] : memref<4x1x8xf32, #tpu.memory_space<vmem>>, vector<1x1x8xf32>
      %127 = vector.shape_cast %126 : vector<1x1x8xf32> to vector<1x8xf32>
      %128 = vector.broadcast %127 : vector<1x8xf32> to vector<8x8xf32>
      %129 = arith.addf %125, %128 : vector<8x8xf32>
      %c0_95 = arith.constant 0 : index
      %c0_96 = arith.constant 0 : index
      %c0_97 = arith.constant 0 : index
      %130 = vector.load %arg12[%c0_95, %c0_96, %c0_97] : memref<4x8x8xf32, #tpu.memory_space<vmem>>, vector<1x8x8xf32>
      %131 = vector.shape_cast %130 : vector<1x8x8xf32> to vector<8x8xf32>
      %132 = vector.shape_cast %129 : vector<8x8xf32> to vector<1x8x8xf32>
      tpu.vector_store %arg12[%c0_95, %c0_96, %c0_97], %132 {strides = array<i32>} : memref<4x8x8xf32, #tpu.memory_space<vmem>>, vector<1x8x8xf32>,
      %c0_98 = arith.constant 0 : index
      %c0_99 = arith.constant 0 : index
      %c0_100 = arith.constant 0 : index
      %133 = vector.load %arg7[%c0_98, %c0_99, %c0_100] : memref<4x32x8xf32, #tpu.memory_space<vmem>>, vector<1x32x8xf32>
      %134 = vector.shape_cast %133 : vector<1x32x8xf32> to vector<32x8xf32>
      %cst_101 = arith.constant dense<0.000000e+00> : vector<8x8xf32>
      %135 = tpu.matmul %122, %134, %cst_101 {dimension_numbers = #tpu.dot_dimension_numbers<[1], [0], [0], [1], [0, 0, 1, 1], [], []>} : vector<8x32xf32>, vector<32x8xf32>, vector<8x8xf32> -> vector<8x8xf32>
      %c0_102 = arith.constant 0 : index
      %c0_103 = arith.constant 0 : index
      %c0_104 = arith.constant 0 : index
      %136 = vector.load %arg8[%c0_102, %c0_103, %c0_104] : memref<4x1x8xf32, #tpu.memory_space<vmem>>, vector<1x1x8xf32>
      %137 = vector.shape_cast %136 : vector<1x1x8xf32> to vector<1x8xf32>
      %138 = vector.broadcast %137 : vector<1x8xf32> to vector<8x8xf32>
      %139 = arith.addf %135, %138 : vector<8x8xf32>
      %c0_105 = arith.constant 0 : index
      %c0_106 = arith.constant 0 : index
      %c0_107 = arith.constant 0 : index
      %140 = vector.load %arg13[%c0_105, %c0_106, %c0_107] : memref<4x8x8xf32, #tpu.memory_space<vmem>>, vector<1x8x8xf32>
      %141 = vector.shape_cast %140 : vector<1x8x8xf32> to vector<8x8xf32>
      %142 = vector.shape_cast %139 : vector<8x8xf32> to vector<1x8x8xf32>
      tpu.vector_store %arg13[%c0_105, %c0_106, %c0_107], %142 {strides = array<i32>} : memref<4x8x8xf32, #tpu.memory_space<vmem>>, vector<1x8x8xf32>,
      %c1_108 = arith.constant 1 : index
      %c0_109 = arith.constant 0 : index
      %c0_110 = arith.constant 0 : index
      %143 = vector.load %arg5[%c1_108, %c0_109, %c0_110] : memref<4x32x8xf32, #tpu.memory_space<vmem>>, vector<1x32x8xf32>
      %144 = vector.shape_cast %143 : vector<1x32x8xf32> to vector<32x8xf32>
      %cst_111 = arith.constant dense<0.000000e+00> : vector<8x8xf32>
      %145 = tpu.matmul %122, %144, %cst_111 {dimension_numbers = #tpu.dot_dimension_numbers<[1], [0], [0], [1], [0, 0, 1, 1], [], []>} : vector<8x32xf32>, vector<32x8xf32>, vector<8x8xf32> -> vector<8x8xf32>
      %c1_112 = arith.constant 1 : index
      %c0_113 = arith.constant 0 : index
      %c0_114 = arith.constant 0 : index
      %146 = vector.load %arg6[%c1_112, %c0_113, %c0_114] : memref<4x1x8xf32, #tpu.memory_space<vmem>>, vector<1x1x8xf32>
      %147 = vector.shape_cast %146 : vector<1x1x8xf32> to vector<1x8xf32>
      %148 = vector.broadcast %147 : vector<1x8xf32> to vector<8x8xf32>
      %149 = arith.addf %145, %148 : vector<8x8xf32>
      %c1_115 = arith.constant 1 : index
      %c0_116 = arith.constant 0 : index
      %c0_117 = arith.constant 0 : index
      %150 = vector.load %arg12[%c1_115, %c0_116, %c0_117] : memref<4x8x8xf32, #tpu.memory_space<vmem>>, vector<1x8x8xf32>
      %151 = vector.shape_cast %150 : vector<1x8x8xf32> to vector<8x8xf32>
      %152 = vector.shape_cast %149 : vector<8x8xf32> to vector<1x8x8xf32>
      tpu.vector_store %arg12[%c1_115, %c0_116, %c0_117], %152 {strides = array<i32>} : memref<4x8x8xf32, #tpu.memory_space<vmem>>, vector<1x8x8xf32>,
      %c1_118 = arith.constant 1 : index
      %c0_119 = arith.constant 0 : index
      %c0_120 = arith.constant 0 : index
      %153 = vector.load %arg7[%c1_118, %c0_119, %c0_120] : memref<4x32x8xf32, #tpu.memory_space<vmem>>, vector<1x32x8xf32>
      %154 = vector.shape_cast %153 : vector<1x32x8xf32> to vector<32x8xf32>
      %cst_121 = arith.constant dense<0.000000e+00> : vector<8x8xf32>
      %155 = tpu.matmul %122, %154, %cst_121 {dimension_numbers = #tpu.dot_dimension_numbers<[1], [0], [0], [1], [0, 0, 1, 1], [], []>} : vector<8x32xf32>, vector<32x8xf32>, vector<8x8xf32> -> vector<8x8xf32>
      %c1_122 = arith.constant 1 : index
      %c0_123 = arith.constant 0 : index
      %c0_124 = arith.constant 0 : index
      %156 = vector.load %arg8[%c1_122, %c0_123, %c0_124] : memref<4x1x8xf32, #tpu.memory_space<vmem>>, vector<1x1x8xf32>
      %157 = vector.shape_cast %156 : vector<1x1x8xf32> to vector<1x8xf32>
      %158 = vector.broadcast %157 : vector<1x8xf32> to vector<8x8xf32>
      %159 = arith.addf %155, %158 : vector<8x8xf32>
      %c1_125 = arith.constant 1 : index
      %c0_126 = arith.constant 0 : index
      %c0_127 = arith.constant 0 : index
      %160 = vector.load %arg13[%c1_125, %c0_126, %c0_127] : memref<4x8x8xf32, #tpu.memory_space<vmem>>, vector<1x8x8xf32>
      %161 = vector.shape_cast %160 : vector<1x8x8xf32> to vector<8x8xf32>
      %162 = vector.shape_cast %159 : vector<8x8xf32> to vector<1x8x8xf32>
      tpu.vector_store %arg13[%c1_125, %c0_126, %c0_127], %162 {strides = array<i32>} : memref<4x8x8xf32, #tpu.memory_space<vmem>>, vector<1x8x8xf32>,
      %c2_128 = arith.constant 2 : index
      %c0_129 = arith.constant 0 : index
      %c0_130 = arith.constant 0 : index
      %163 = vector.load %arg5[%c2_128, %c0_129, %c0_130] : memref<4x32x8xf32, #tpu.memory_space<vmem>>, vector<1x32x8xf32>
      %164 = vector.shape_cast %163 : vector<1x32x8xf32> to vector<32x8xf32>
      %cst_131 = arith.constant dense<0.000000e+00> : vector<8x8xf32>
      %165 = tpu.matmul %122, %164, %cst_131 {dimension_numbers = #tpu.dot_dimension_numbers<[1], [0], [0], [1], [0, 0, 1, 1], [], []>} : vector<8x32xf32>, vector<32x8xf32>, vector<8x8xf32> -> vector<8x8xf32>
      %c2_132 = arith.constant 2 : index
      %c0_133 = arith.constant 0 : index
      %c0_134 = arith.constant 0 : index
      %166 = vector.load %arg6[%c2_132, %c0_133, %c0_134] : memref<4x1x8xf32, #tpu.memory_space<vmem>>, vector<1x1x8xf32>
      %167 = vector.shape_cast %166 : vector<1x1x8xf32> to vector<1x8xf32>
      %168 = vector.broadcast %167 : vector<1x8xf32> to vector<8x8xf32>
      %169 = arith.addf %165, %168 : vector<8x8xf32>
      %c2_135 = arith.constant 2 : index
      %c0_136 = arith.constant 0 : index
      %c0_137 = arith.constant 0 : index
      %170 = vector.load %arg12[%c2_135, %c0_136, %c0_137] : memref<4x8x8xf32, #tpu.memory_space<vmem>>, vector<1x8x8xf32>
      %171 = vector.shape_cast %170 : vector<1x8x8xf32> to vector<8x8xf32>
      %172 = vector.shape_cast %169 : vector<8x8xf32> to vector<1x8x8xf32>
      tpu.vector_store %arg12[%c2_135, %c0_136, %c0_137], %172 {strides = array<i32>} : memref<4x8x8xf32, #tpu.memory_space<vmem>>, vector<1x8x8xf32>,
      %c2_138 = arith.constant 2 : index
      %c0_139 = arith.constant 0 : index
      %c0_140 = arith.constant 0 : index
      %173 = vector.load %arg7[%c2_138, %c0_139, %c0_140] : memref<4x32x8xf32, #tpu.memory_space<vmem>>, vector<1x32x8xf32>
      %174 = vector.shape_cast %173 : vector<1x32x8xf32> to vector<32x8xf32>
      %cst_141 = arith.constant dense<0.000000e+00> : vector<8x8xf32>
      %175 = tpu.matmul %122, %174, %cst_141 {dimension_numbers = #tpu.dot_dimension_numbers<[1], [0], [0], [1], [0, 0, 1, 1], [], []>} : vector<8x32xf32>, vector<32x8xf32>, vector<8x8xf32> -> vector<8x8xf32>
      %c2_142 = arith.constant 2 : index
      %c0_143 = arith.constant 0 : index
      %c0_144 = arith.constant 0 : index
      %176 = vector.load %arg8[%c2_142, %c0_143, %c0_144] : memref<4x1x8xf32, #tpu.memory_space<vmem>>, vector<1x1x8xf32>
      %177 = vector.shape_cast %176 : vector<1x1x8xf32> to vector<1x8xf32>
      %178 = vector.broadcast %177 : vector<1x8xf32> to vector<8x8xf32>
      %179 = arith.addf %175, %178 : vector<8x8xf32>
      %c2_145 = arith.constant 2 : index
      %c0_146 = arith.constant 0 : index
      %c0_147 = arith.constant 0 : index
      %180 = vector.load %arg13[%c2_145, %c0_146, %c0_147] : memref<4x8x8xf32, #tpu.memory_space<vmem>>, vector<1x8x8xf32>
      %181 = vector.shape_cast %180 : vector<1x8x8xf32> to vector<8x8xf32>
      %182 = vector.shape_cast %179 : vector<8x8xf32> to vector<1x8x8xf32>
      tpu.vector_store %arg13[%c2_145, %c0_146, %c0_147], %182 {strides = array<i32>} : memref<4x8x8xf32, #tpu.memory_space<vmem>>, vector<1x8x8xf32>,
      %c3_148 = arith.constant 3 : index
      %c0_149 = arith.constant 0 : index
      %c0_150 = arith.constant 0 : index
      %183 = vector.load %arg5[%c3_148, %c0_149, %c0_150] : memref<4x32x8xf32, #tpu.memory_space<vmem>>, vector<1x32x8xf32>
      %184 = vector.shape_cast %183 : vector<1x32x8xf32> to vector<32x8xf32>
      %cst_151 = arith.constant dense<0.000000e+00> : vector<8x8xf32>
      %185 = tpu.matmul %122, %184, %cst_151 {dimension_numbers = #tpu.dot_dimension_numbers<[1], [0], [0], [1], [0, 0, 1, 1], [], []>} : vector<8x32xf32>, vector<32x8xf32>, vector<8x8xf32> -> vector<8x8xf32>
      %c3_152 = arith.constant 3 : index
      %c0_153 = arith.constant 0 : index
      %c0_154 = arith.constant 0 : index
      %186 = vector.load %arg6[%c3_152, %c0_153, %c0_154] : memref<4x1x8xf32, #tpu.memory_space<vmem>>, vector<1x1x8xf32>
      %187 = vector.shape_cast %186 : vector<1x1x8xf32> to vector<1x8xf32>
      %188 = vector.broadcast %187 : vector<1x8xf32> to vector<8x8xf32>
      %189 = arith.addf %185, %188 : vector<8x8xf32>
      %c3_155 = arith.constant 3 : index
      %c0_156 = arith.constant 0 : index
      %c0_157 = arith.constant 0 : index
      %190 = vector.load %arg12[%c3_155, %c0_156, %c0_157] : memref<4x8x8xf32, #tpu.memory_space<vmem>>, vector<1x8x8xf32>
      %191 = vector.shape_cast %190 : vector<1x8x8xf32> to vector<8x8xf32>
      %192 = vector.shape_cast %189 : vector<8x8xf32> to vector<1x8x8xf32>
      tpu.vector_store %arg12[%c3_155, %c0_156, %c0_157], %192 {strides = array<i32>} : memref<4x8x8xf32, #tpu.memory_space<vmem>>, vector<1x8x8xf32>,
      %c3_158 = arith.constant 3 : index
      %c0_159 = arith.constant 0 : index
      %c0_160 = arith.constant 0 : index
      %193 = vector.load %arg7[%c3_158, %c0_159, %c0_160] : memref<4x32x8xf32, #tpu.memory_space<vmem>>, vector<1x32x8xf32>
      %194 = vector.shape_cast %193 : vector<1x32x8xf32> to vector<32x8xf32>
      %cst_161 = arith.constant dense<0.000000e+00> : vector<8x8xf32>
      %195 = tpu.matmul %122, %194, %cst_161 {dimension_numbers = #tpu.dot_dimension_numbers<[1], [0], [0], [1], [0, 0, 1, 1], [], []>} : vector<8x32xf32>, vector<32x8xf32>, vector<8x8xf32> -> vector<8x8xf32>
      %c3_162 = arith.constant 3 : index
      %c0_163 = arith.constant 0 : index
      %c0_164 = arith.constant 0 : index
      %196 = vector.load %arg8[%c3_162, %c0_163, %c0_164] : memref<4x1x8xf32, #tpu.memory_space<vmem>>, vector<1x1x8xf32>
      %197 = vector.shape_cast %196 : vector<1x1x8xf32> to vector<1x8xf32>
      %198 = vector.broadcast %197 : vector<1x8xf32> to vector<8x8xf32>
      %199 = arith.addf %195, %198 : vector<8x8xf32>
      %c3_165 = arith.constant 3 : index
      %c0_166 = arith.constant 0 : index
      %c0_167 = arith.constant 0 : index
      %200 = vector.load %arg13[%c3_165, %c0_166, %c0_167] : memref<4x8x8xf32, #tpu.memory_space<vmem>>, vector<1x8x8xf32>
      %201 = vector.shape_cast %200 : vector<1x8x8xf32> to vector<8x8xf32>
      %202 = vector.shape_cast %199 : vector<8x8xf32> to vector<1x8x8xf32>
      tpu.vector_store %arg13[%c3_165, %c0_166, %c0_167], %202 {strides = array<i32>} : memref<4x8x8xf32, #tpu.memory_space<vmem>>, vector<1x8x8xf32>,
    } else {
    }
    %c8_i32 = arith.constant 8 : i32
    %3 = arith.muli %arg1, %c8_i32 : i32
    %4 = tpu.assume_multiple %3, 8 : i32
    %c0 = arith.constant 0 : index
    %5 = arith.index_cast %4 : i32 to index
    %c0_1 = arith.constant 0 : index
    %6 = vector.load %arg2[%c0, %5, %c0_1] : memref<1x8x32xf32, #tpu.memory_space<vmem>>, vector<1x8x32xf32>
    %7 = vector.shape_cast %6 : vector<1x8x32xf32> to vector<8x32xf32>
    %c0_2 = arith.constant 0 : index
    %c0_3 = arith.constant 0 : index
    %c0_4 = arith.constant 0 : index
    %8 = vector.load %arg3[%c0_2, %c0_3, %c0_4] : memref<4x32x8xf32, #tpu.memory_space<vmem>>, vector<1x32x8xf32>
    %9 = vector.shape_cast %8 : vector<1x32x8xf32> to vector<32x8xf32>
    %cst = arith.constant dense<0.000000e+00> : vector<8x8xf32>
    %10 = tpu.matmul %7, %9, %cst {dimension_numbers = #tpu.dot_dimension_numbers<[1], [0], [0], [1], [0, 0, 1, 1], [], []>} : vector<8x32xf32>, vector<32x8xf32>, vector<8x8xf32> -> vector<8x8xf32>
    %c0_5 = arith.constant 0 : index
    %c0_6 = arith.constant 0 : index
    %c0_7 = arith.constant 0 : index
    %11 = vector.load %arg4[%c0_5, %c0_6, %c0_7] : memref<4x1x8xf32, #tpu.memory_space<vmem>>, vector<1x1x8xf32>
    %12 = vector.shape_cast %11 : vector<1x1x8xf32> to vector<1x8xf32>
    %13 = vector.broadcast %12 : vector<1x8xf32> to vector<8x8xf32>
    %14 = arith.addf %10, %13 : vector<8x8xf32>
    %cst_8 = arith.constant 0.176776692 : f32
    %15 = vector.broadcast %cst_8 : f32 to vector<8x8xf32>
    %16 = arith.mulf %14, %15 : vector<8x8xf32>
    %c0_9 = arith.constant 0 : index
    %c0_10 = arith.constant 0 : index
    %c0_11 = arith.constant 0 : index
    %17 = vector.load %arg12[%c0_9, %c0_10, %c0_11] : memref<4x8x8xf32, #tpu.memory_space<vmem>>, vector<1x8x8xf32>
    %18 = vector.shape_cast %17 : vector<1x8x8xf32> to vector<8x8xf32>
    %cst_12 = arith.constant dense<0.000000e+00> : vector<8x8xf32>
    %19 = tpu.matmul %16, %18, %cst_12 {dimension_numbers = #tpu.dot_dimension_numbers<[1], [1], [0], [0], [0, 0, 1, 0], [], []>} : vector<8x8xf32>, vector<8x8xf32>, vector<8x8xf32> -> vector<8x8xf32>
    %cst_13 = arith.constant dense<0xFF800000> : vector<8xf32>
    %20 = vector.multi_reduction <maximumf>, %19, %cst_13 [1] : vector<8x8xf32> to vector<8xf32>
    %21 = vector.shape_cast %20 : vector<8xf32> to vector<8x1xf32>
    %22 = vector.broadcast %21 : vector<8x1xf32> to vector<8x8xf32>
    %23 = arith.subf %19, %22 : vector<8x8xf32>
    %24 = math.exp %23 : vector<8x8xf32>
    %cst_14 = arith.constant dense<0.000000e+00> : vector<8xf32>
    %25 = vector.multi_reduction <add>, %24, %cst_14 [1] : vector<8x8xf32> to vector<8xf32>
    %26 = vector.shape_cast %25 : vector<8xf32> to vector<8x1xf32>
    %c0_15 = arith.constant 0 : index
    %c0_16 = arith.constant 0 : index
    %c0_17 = arith.constant 0 : index
    %27 = vector.load %arg13[%c0_15, %c0_16, %c0_17] : memref<4x8x8xf32, #tpu.memory_space<vmem>>, vector<1x8x8xf32>
    %28 = vector.shape_cast %27 : vector<1x8x8xf32> to vector<8x8xf32>
    %cst_18 = arith.constant dense<0.000000e+00> : vector<8x8xf32>
    %29 = tpu.matmul %24, %28, %cst_18 {dimension_numbers = #tpu.dot_dimension_numbers<[1], [0], [0], [1], [0, 0, 1, 1], [], []>} : vector<8x8xf32>, vector<8x8xf32>, vector<8x8xf32> -> vector<8x8xf32>
    %30 = tpu.reciprocal %26 {approx = true} : vector<8x1xf32> -> vector<8x1xf32>
    %31 = vector.broadcast %30 : vector<8x1xf32> to vector<8x8xf32>
    %32 = arith.mulf %29, %31 : vector<8x8xf32>
    %c0_19 = arith.constant 0 : index
    %c0_20 = arith.constant 0 : index
    %33 = vector.load %arg14[%c0_19, %c0_20] : memref<8x32xf32, #tpu.memory_space<vmem>>, vector<8x8xf32>
    tpu.vector_store %arg14[%c0_19, %c0_20], %32 {strides = array<i32>} : memref<8x32xf32, #tpu.memory_space<vmem>>, vector<8x8xf32>,
    %c1 = arith.constant 1 : index
    %c0_21 = arith.constant 0 : index
    %c0_22 = arith.constant 0 : index
    %34 = vector.load %arg3[%c1, %c0_21, %c0_22] : memref<4x32x8xf32, #tpu.memory_space<vmem>>, vector<1x32x8xf32>
    %35 = vector.shape_cast %34 : vector<1x32x8xf32> to vector<32x8xf32>
    %cst_23 = arith.constant dense<0.000000e+00> : vector<8x8xf32>
    %36 = tpu.matmul %7, %35, %cst_23 {dimension_numbers = #tpu.dot_dimension_numbers<[1], [0], [0], [1], [0, 0, 1, 1], [], []>} : vector<8x32xf32>, vector<32x8xf32>, vector<8x8xf32> -> vector<8x8xf32>
    %c1_24 = arith.constant 1 : index
    %c0_25 = arith.constant 0 : index
    %c0_26 = arith.constant 0 : index
    %37 = vector.load %arg4[%c1_24, %c0_25, %c0_26] : memref<4x1x8xf32, #tpu.memory_space<vmem>>, vector<1x1x8xf32>
    %38 = vector.shape_cast %37 : vector<1x1x8xf32> to vector<1x8xf32>
    %39 = vector.broadcast %38 : vector<1x8xf32> to vector<8x8xf32>
    %40 = arith.addf %36, %39 : vector<8x8xf32>
    %cst_27 = arith.constant 0.176776692 : f32
    %41 = vector.broadcast %cst_27 : f32 to vector<8x8xf32>
    %42 = arith.mulf %40, %41 : vector<8x8xf32>
    %c1_28 = arith.constant 1 : index
    %c0_29 = arith.constant 0 : index
    %c0_30 = arith.constant 0 : index
    %43 = vector.load %arg12[%c1_28, %c0_29, %c0_30] : memref<4x8x8xf32, #tpu.memory_space<vmem>>, vector<1x8x8xf32>
    %44 = vector.shape_cast %43 : vector<1x8x8xf32> to vector<8x8xf32>
    %cst_31 = arith.constant dense<0.000000e+00> : vector<8x8xf32>
    %45 = tpu.matmul %42, %44, %cst_31 {dimension_numbers = #tpu.dot_dimension_numbers<[1], [1], [0], [0], [0, 0, 1, 0], [], []>} : vector<8x8xf32>, vector<8x8xf32>, vector<8x8xf32> -> vector<8x8xf32>
    %cst_32 = arith.constant dense<0xFF800000> : vector<8xf32>
    %46 = vector.multi_reduction <maximumf>, %45, %cst_32 [1] : vector<8x8xf32> to vector<8xf32>
    %47 = vector.shape_cast %46 : vector<8xf32> to vector<8x1xf32>
    %48 = vector.broadcast %47 : vector<8x1xf32> to vector<8x8xf32>
    %49 = arith.subf %45, %48 : vector<8x8xf32>
    %50 = math.exp %49 : vector<8x8xf32>
    %cst_33 = arith.constant dense<0.000000e+00> : vector<8xf32>
    %51 = vector.multi_reduction <add>, %50, %cst_33 [1] : vector<8x8xf32> to vector<8xf32>
    %52 = vector.shape_cast %51 : vector<8xf32> to vector<8x1xf32>
    %c1_34 = arith.constant 1 : index
    %c0_35 = arith.constant 0 : index
    %c0_36 = arith.constant 0 : index
    %53 = vector.load %arg13[%c1_34, %c0_35, %c0_36] : memref<4x8x8xf32, #tpu.memory_space<vmem>>, vector<1x8x8xf32>
    %54 = vector.shape_cast %53 : vector<1x8x8xf32> to vector<8x8xf32>
    %cst_37 = arith.constant dense<0.000000e+00> : vector<8x8xf32>
    %55 = tpu.matmul %50, %54, %cst_37 {dimension_numbers = #tpu.dot_dimension_numbers<[1], [0], [0], [1], [0, 0, 1, 1], [], []>} : vector<8x8xf32>, vector<8x8xf32>, vector<8x8xf32> -> vector<8x8xf32>
    %56 = tpu.reciprocal %52 {approx = true} : vector<8x1xf32> -> vector<8x1xf32>
    %57 = vector.broadcast %56 : vector<8x1xf32> to vector<8x8xf32>
    %58 = arith.mulf %55, %57 : vector<8x8xf32>
    %c0_38 = arith.constant 0 : index
    %c8 = arith.constant 8 : index
    %59 = vector.load %arg14[%c0_38, %c8] : memref<8x32xf32, #tpu.memory_space<vmem>>, vector<8x8xf32>
    tpu.vector_store %arg14[%c0_38, %c8], %58 {strides = array<i32>} : memref<8x32xf32, #tpu.memory_space<vmem>>, vector<8x8xf32>,
    %c2 = arith.constant 2 : index
    %c0_39 = arith.constant 0 : index
    %c0_40 = arith.constant 0 : index
    %60 = vector.load %arg3[%c2, %c0_39, %c0_40] : memref<4x32x8xf32, #tpu.memory_space<vmem>>, vector<1x32x8xf32>
    %61 = vector.shape_cast %60 : vector<1x32x8xf32> to vector<32x8xf32>
    %cst_41 = arith.constant dense<0.000000e+00> : vector<8x8xf32>
    %62 = tpu.matmul %7, %61, %cst_41 {dimension_numbers = #tpu.dot_dimension_numbers<[1], [0], [0], [1], [0, 0, 1, 1], [], []>} : vector<8x32xf32>, vector<32x8xf32>, vector<8x8xf32> -> vector<8x8xf32>
    %c2_42 = arith.constant 2 : index
    %c0_43 = arith.constant 0 : index
    %c0_44 = arith.constant 0 : index
    %63 = vector.load %arg4[%c2_42, %c0_43, %c0_44] : memref<4x1x8xf32, #tpu.memory_space<vmem>>, vector<1x1x8xf32>
    %64 = vector.shape_cast %63 : vector<1x1x8xf32> to vector<1x8xf32>
    %65 = vector.broadcast %64 : vector<1x8xf32> to vector<8x8xf32>
    %66 = arith.addf %62, %65 : vector<8x8xf32>
    %cst_45 = arith.constant 0.176776692 : f32
    %67 = vector.broadcast %cst_45 : f32 to vector<8x8xf32>
    %68 = arith.mulf %66, %67 : vector<8x8xf32>
    %c2_46 = arith.constant 2 : index
    %c0_47 = arith.constant 0 : index
    %c0_48 = arith.constant 0 : index
    %69 = vector.load %arg12[%c2_46, %c0_47, %c0_48] : memref<4x8x8xf32, #tpu.memory_space<vmem>>, vector<1x8x8xf32>
    %70 = vector.shape_cast %69 : vector<1x8x8xf32> to vector<8x8xf32>
    %cst_49 = arith.constant dense<0.000000e+00> : vector<8x8xf32>
    %71 = tpu.matmul %68, %70, %cst_49 {dimension_numbers = #tpu.dot_dimension_numbers<[1], [1], [0], [0], [0, 0, 1, 0], [], []>} : vector<8x8xf32>, vector<8x8xf32>, vector<8x8xf32> -> vector<8x8xf32>
    %cst_50 = arith.constant dense<0xFF800000> : vector<8xf32>
    %72 = vector.multi_reduction <maximumf>, %71, %cst_50 [1] : vector<8x8xf32> to vector<8xf32>
    %73 = vector.shape_cast %72 : vector<8xf32> to vector<8x1xf32>
    %74 = vector.broadcast %73 : vector<8x1xf32> to vector<8x8xf32>
    %75 = arith.subf %71, %74 : vector<8x8xf32>
    %76 = math.exp %75 : vector<8x8xf32>
    %cst_51 = arith.constant dense<0.000000e+00> : vector<8xf32>
    %77 = vector.multi_reduction <add>, %76, %cst_51 [1] : vector<8x8xf32> to vector<8xf32>
    %78 = vector.shape_cast %77 : vector<8xf32> to vector<8x1xf32>
    %c2_52 = arith.constant 2 : index
    %c0_53 = arith.constant 0 : index
    %c0_54 = arith.constant 0 : index
    %79 = vector.load %arg13[%c2_52, %c0_53, %c0_54] : memref<4x8x8xf32, #tpu.memory_space<vmem>>, vector<1x8x8xf32>
    %80 = vector.shape_cast %79 : vector<1x8x8xf32> to vector<8x8xf32>
    %cst_55 = arith.constant dense<0.000000e+00> : vector<8x8xf32>
    %81 = tpu.matmul %76, %80, %cst_55 {dimension_numbers = #tpu.dot_dimension_numbers<[1], [0], [0], [1], [0, 0, 1, 1], [], []>} : vector<8x8xf32>, vector<8x8xf32>, vector<8x8xf32> -> vector<8x8xf32>
    %82 = tpu.reciprocal %78 {approx = true} : vector<8x1xf32> -> vector<8x1xf32>
    %83 = vector.broadcast %82 : vector<8x1xf32> to vector<8x8xf32>
    %84 = arith.mulf %81, %83 : vector<8x8xf32>
    %c0_56 = arith.constant 0 : index
    %c16 = arith.constant 16 : index
    %85 = vector.load %arg14[%c0_56, %c16] : memref<8x32xf32, #tpu.memory_space<vmem>>, vector<8x8xf32>
    tpu.vector_store %arg14[%c0_56, %c16], %84 {strides = array<i32>} : memref<8x32xf32, #tpu.memory_space<vmem>>, vector<8x8xf32>,
    %c3 = arith.constant 3 : index
    %c0_57 = arith.constant 0 : index
    %c0_58 = arith.constant 0 : index
    %86 = vector.load %arg3[%c3, %c0_57, %c0_58] : memref<4x32x8xf32, #tpu.memory_space<vmem>>, vector<1x32x8xf32>
    %87 = vector.shape_cast %86 : vector<1x32x8xf32> to vector<32x8xf32>
    %cst_59 = arith.constant dense<0.000000e+00> : vector<8x8xf32>
    %88 = tpu.matmul %7, %87, %cst_59 {dimension_numbers = #tpu.dot_dimension_numbers<[1], [0], [0], [1], [0, 0, 1, 1], [], []>} : vector<8x32xf32>, vector<32x8xf32>, vector<8x8xf32> -> vector<8x8xf32>
    %c3_60 = arith.constant 3 : index
    %c0_61 = arith.constant 0 : index
    %c0_62 = arith.constant 0 : index
    %89 = vector.load %arg4[%c3_60, %c0_61, %c0_62] : memref<4x1x8xf32, #tpu.memory_space<vmem>>, vector<1x1x8xf32>
    %90 = vector.shape_cast %89 : vector<1x1x8xf32> to vector<1x8xf32>
    %91 = vector.broadcast %90 : vector<1x8xf32> to vector<8x8xf32>
    %92 = arith.addf %88, %91 : vector<8x8xf32>
    %cst_63 = arith.constant 0.176776692 : f32
    %93 = vector.broadcast %cst_63 : f32 to vector<8x8xf32>
    %94 = arith.mulf %92, %93 : vector<8x8xf32>
    %c3_64 = arith.constant 3 : index
    %c0_65 = arith.constant 0 : index
    %c0_66 = arith.constant 0 : index
    %95 = vector.load %arg12[%c3_64, %c0_65, %c0_66] : memref<4x8x8xf32, #tpu.memory_space<vmem>>, vector<1x8x8xf32>
    %96 = vector.shape_cast %95 : vector<1x8x8xf32> to vector<8x8xf32>
    %cst_67 = arith.constant dense<0.000000e+00> : vector<8x8xf32>
    %97 = tpu.matmul %94, %96, %cst_67 {dimension_numbers = #tpu.dot_dimension_numbers<[1], [1], [0], [0], [0, 0, 1, 0], [], []>} : vector<8x8xf32>, vector<8x8xf32>, vector<8x8xf32> -> vector<8x8xf32>
    %cst_68 = arith.constant dense<0xFF800000> : vector<8xf32>
    %98 = vector.multi_reduction <maximumf>, %97, %cst_68 [1] : vector<8x8xf32> to vector<8xf32>
    %99 = vector.shape_cast %98 : vector<8xf32> to vector<8x1xf32>
    %100 = vector.broadcast %99 : vector<8x1xf32> to vector<8x8xf32>
    %101 = arith.subf %97, %100 : vector<8x8xf32>
    %102 = math.exp %101 : vector<8x8xf32>
    %cst_69 = arith.constant dense<0.000000e+00> : vector<8xf32>
    %103 = vector.multi_reduction <add>, %102, %cst_69 [1] : vector<8x8xf32> to vector<8xf32>
    %104 = vector.shape_cast %103 : vector<8xf32> to vector<8x1xf32>
    %c3_70 = arith.constant 3 : index
    %c0_71 = arith.constant 0 : index
    %c0_72 = arith.constant 0 : index
    %105 = vector.load %arg13[%c3_70, %c0_71, %c0_72] : memref<4x8x8xf32, #tpu.memory_space<vmem>>, vector<1x8x8xf32>
    %106 = vector.shape_cast %105 : vector<1x8x8xf32> to vector<8x8xf32>
    %cst_73 = arith.constant dense<0.000000e+00> : vector<8x8xf32>
    %107 = tpu.matmul %102, %106, %cst_73 {dimension_numbers = #tpu.dot_dimension_numbers<[1], [0], [0], [1], [0, 0, 1, 1], [], []>} : vector<8x8xf32>, vector<8x8xf32>, vector<8x8xf32> -> vector<8x8xf32>
    %108 = tpu.reciprocal %104 {approx = true} : vector<8x1xf32> -> vector<8x1xf32>
    %109 = vector.broadcast %108 : vector<8x1xf32> to vector<8x8xf32>
    %110 = arith.mulf %107, %109 : vector<8x8xf32>
    %c0_74 = arith.constant 0 : index
    %c24 = arith.constant 24 : index
    %111 = vector.load %arg14[%c0_74, %c24] : memref<8x32xf32, #tpu.memory_space<vmem>>, vector<8x8xf32>
    tpu.vector_store %arg14[%c0_74, %c24], %110 {strides = array<i32>} : memref<8x32xf32, #tpu.memory_space<vmem>>, vector<8x8xf32>,
    %c0_75 = arith.constant 0 : index
    %c0_76 = arith.constant 0 : index
    %112 = vector.load %arg14[%c0_75, %c0_76] : memref<8x32xf32, #tpu.memory_space<vmem>>, vector<8x32xf32>
    %c0_77 = arith.constant 0 : index
    %c0_78 = arith.constant 0 : index
    %113 = vector.load %arg9[%c0_77, %c0_78] : memref<32x32xf32, #tpu.memory_space<vmem>>, vector<32x32xf32>
    %cst_79 = arith.constant dense<0.000000e+00> : vector<8x32xf32>
    %114 = tpu.matmul %112, %113, %cst_79 {dimension_numbers = #tpu.dot_dimension_numbers<[1], [0], [0], [1], [0, 0, 1, 1], [], []>} : vector<8x32xf32>, vector<32x32xf32>, vector<8x32xf32> -> vector<8x32xf32>
    %c0_80 = arith.constant 0 : index
    %c0_81 = arith.constant 0 : index
    %115 = vector.load %arg10[%c0_80, %c0_81] : memref<1x32xf32, #tpu.memory_space<vmem>>, vector<1x32xf32>
    %116 = vector.broadcast %115 : vector<1x32xf32> to vector<8x32xf32>
    %117 = arith.addf %114, %116 : vector<8x32xf32>
    %c0_82 = arith.constant 0 : index
    %c0_83 = arith.constant 0 : index
    %c0_84 = arith.constant 0 : index
    %118 = vector.load %arg11[%c0_82, %c0_83, %c0_84] : memref<1x8x32xf32, #tpu.memory_space<vmem>>, vector<1x8x32xf32>
    %119 = vector.shape_cast %118 : vector<1x8x32xf32> to vector<8x32xf32>
    %120 = vector.shape_cast %117 : vector<8x32xf32> to vector<1x8x32xf32>
    tpu.vector_store %arg11[%c0_82, %c0_83, %c0_84], %120 {strides = array<i32>} : memref<1x8x32xf32, #tpu.memory_space<vmem>>, vector<1x8x32xf32>,
    return
  }
  func.func @transform_0(%arg0: i32, %arg1: i32) -> (i32, i32, i32) {
    %c0_i32 = arith.constant 0 : i32
    %c0_i32_0 = arith.constant 0 : i32
    %c0_i32_1 = arith.constant 0 : i32
    return %arg0, %c0_i32, %c0_i32_0 : i32, i32, i32
  }
  func.func @transform_1(%arg0: i32, %arg1: i32) -> (i32, i32, i32) {
    %c0_i32 = arith.constant 0 : i32
    %c0_i32_0 = arith.constant 0 : i32
    %c0_i32_1 = arith.constant 0 : i32
    %c0_i32_2 = arith.constant 0 : i32
    return %c0_i32, %c0_i32_0, %c0_i32_1 : i32, i32, i32
  }
  func.func @transform_2(%arg0: i32, %arg1: i32) -> (i32, i32, i32) {
    %c0_i32 = arith.constant 0 : i32
    %c0_i32_0 = arith.constant 0 : i32
    %c0_i32_1 = arith.constant 0 : i32
    %c0_i32_2 = arith.constant 0 : i32
    return %c0_i32, %c0_i32_0, %c0_i32_1 : i32, i32, i32
  }
  func.func @transform_3(%arg0: i32, %arg1: i32) -> (i32, i32, i32) {
    %c0_i32 = arith.constant 0 : i32
    %c0_i32_0 = arith.constant 0 : i32
    %c0_i32_1 = arith.constant 0 : i32
    %c0_i32_2 = arith.constant 0 : i32
    return %c0_i32, %c0_i32_0, %c0_i32_1 : i32, i32, i32
  }
  func.func @transform_4(%arg0: i32, %arg1: i32) -> (i32, i32, i32) {
    %c0_i32 = arith.constant 0 : i32
    %c0_i32_0 = arith.constant 0 : i32
    %c0_i32_1 = arith.constant 0 : i32
    %c0_i32_2 = arith.constant 0 : i32
    return %c0_i32, %c0_i32_0, %c0_i32_1 : i32, i32, i32
  }
  func.func @transform_5(%arg0: i32, %arg1: i32) -> (i32, i32, i32) {
    %c0_i32 = arith.constant 0 : i32
    %c0_i32_0 = arith.constant 0 : i32
    %c0_i32_1 = arith.constant 0 : i32
    %c0_i32_2 = arith.constant 0 : i32
    return %c0_i32, %c0_i32_0, %c0_i32_1 : i32, i32, i32
  }
  func.func @transform_6(%arg0: i32, %arg1: i32) -> (i32, i32, i32) {
    %c0_i32 = arith.constant 0 : i32
    %c0_i32_0 = arith.constant 0 : i32
    %c0_i32_1 = arith.constant 0 : i32
    %c0_i32_2 = arith.constant 0 : i32
    return %c0_i32, %c0_i32_0, %c0_i32_1 : i32, i32, i32
  }
  func.func @transform_7(%arg0: i32, %arg1: i32) -> (i32, i32) {
    %c0_i32 = arith.constant 0 : i32
    %c0_i32_0 = arith.constant 0 : i32
    %c0_i32_1 = arith.constant 0 : i32
    return %c0_i32, %c0_i32_0 : i32, i32
  }
  func.func @transform_8(%arg0: i32, %arg1: i32) -> (i32, i32) {
    %c0_i32 = arith.constant 0 : i32
    %c0_i32_0 = arith.constant 0 : i32
    %c0_i32_1 = arith.constant 0 : i32
    return %c0_i32, %c0_i32_0 : i32, i32
  }
  func.func @transform_9(%arg0: i32, %arg1: i32) -> (i32, i32, i32) {
    %c0_i32 = arith.constant 0 : i32
    %c0_i32_0 = arith.constant 0 : i32
    return %arg0, %arg1, %c0_i32 : i32, i32, i32
  }
}

</mosaic_0001>

<llo_original>
// kernel: tpu_custom_call.1
$region0: #{tpu_custom_call.1}
  #allocation0 [shape = 'u32[]', space=smem, size = 0x4, offset = 0x4, fixed_abs, tag = 'smem constant byte address 0x4 - core index']
  #allocation1 [shape = 'u32[144,128]{1,0:T(1,128)}', space=vmem, size = 0x12000, scoped, tag = 'internal scratch']
  #allocation2 [shape = 'f32[4,8,8]{2,1,0:T(8,128)}', space=vmem, size = 0x4000, scoped, tag = 'scratch operand']
  #allocation3 [shape = 'f32[4,8,8]{2,1,0:T(8,128)}', space=vmem, size = 0x4000, scoped, tag = 'scratch operand']
  #allocation4 [shape = 'f32[8,32]{1,0:T(8,128)}', space=vmem, size = 0x1000, scoped, tag = 'scratch operand']
  %s0 = inlined_call_operand.vmem [shape: f32[2,8,32], index: 0, kind: input, shape index: {}]
  %s1 = inlined_call_operand.vmem [shape: f32[4,32,8], index: 1, kind: input, shape index: {}]
  %s2 = inlined_call_operand.vmem [shape: f32[4,1,8], index: 2, kind: input, shape index: {}]
  %s3 = inlined_call_operand.vmem [shape: f32[4,32,8], index: 3, kind: input, shape index: {}]
  %s4 = inlined_call_operand.vmem [shape: f32[4,1,8], index: 4, kind: input, shape index: {}]
  %s5 = inlined_call_operand.vmem [shape: f32[4,32,8], index: 5, kind: input, shape index: {}]
  %s6 = inlined_call_operand.vmem [shape: f32[4,1,8], index: 6, kind: input, shape index: {}]
  %s7 = inlined_call_operand.vmem [shape: f32[32,32], index: 7, kind: input, shape index: {}]
  %s8 = inlined_call_operand.vmem [shape: f32[1,32], index: 8, kind: input, shape index: {}]
  %s9 = inlined_call_operand.hbm [shape: f32[2,8,32], index: 9, kind: output, shape index: {}]
  %s10 = sld [smem:[#allocation0]]
  $region73: #{tpu_custom_call.1} parent=0
    _
  %s12 = ssub.s32 1, %s10
  %s13 = scalar_select 0, %s12, %s10
  $region1: #{tpu_custom_call.1} parent=0
    #allocation5 [shape = 'u8[8192]{0}', space=vmem, size = 0x2000, scoped, tag = 'output window, operand 0']
    #allocation6 [shape = 's32[2]{0}', space=sflag, size = 0x8, scoped, tag = 'scoped memory for tpu_custom_call.1']
    %14 = vsyncpa [#allocation6], 0
    %s15 = scalar_lea.sflag [#allocation6], 1
    %16 = vsyncpa %s15, 0
    loop: start=0, step=1, limit=4
    $region2: #{tpu_custom_call.1} parent=1 // loop_pre_header
      _
    $region3: #{tpu_custom_call.1} parent=1 // loop_header
      %s18 = sphi 0, %s22
      %p19 = scmp.ge.s32.totalorder %s18, 4
      %s25 = sphi 0, %s37
      %s26 = sphi 0, %s33
      %s27 = sphi 0, %s25
      %s28 = sphi 0, %s26
      %s29 = sphi 0, %s27
      %s30 = sphi 0, %s28
      %s40 = sphi 0, %s42
      %s43 = sphi 0, %s40
      %s44 = sphi 0, %s43
      %s60 = sphi 0, %s44
      %s64 = sphi 0, %s64
      %s66 = sphi 0, %s64
      %s67 = sphi 0, %s66
      %s81 = sphi 0, %s67
      %s85 = sphi 0, %s85
      %s87 = sphi 0, %s85
      %s88 = sphi 0, %s87
      %s102 = sphi 0, %s88
      %s106 = sphi 0, %s106
      %s108 = sphi 0, %s106
      %s109 = sphi 0, %s108
      %s123 = sphi 0, %s109
      %s127 = sphi 0, %s127
      %s129 = sphi 0, %s127
      %s130 = sphi 0, %s129
      %s144 = sphi 0, %s130
      %s148 = sphi 0, %s148
      %s150 = sphi 0, %s148
      %s151 = sphi 0, %s150
      %s165 = sphi 0, %s151
      %s169 = sphi 0, %s169
      %s171 = sphi 0, %s169
      %s172 = sphi 0, %s171
      %s186 = sphi 0, %s172
      %s190 = sphi 0, %s190
      %s192 = sphi 0, %s190
      %s193 = sphi 0, %s192
      %s207 = sphi 0, %s193
      %s211 = sphi 0, %s211
      %s213 = sphi 0, %s211
      %s214 = sphi 0, %s213
      %s228 = sphi 0, %s214
      %s236 = sphi 0, %s238
      %s239 = sphi 0, %s236
      %s240 = sphi 0, %s239
      %s256 = sphi 0, %s240
    $region4: #{tpu_custom_call.1} parent=1 // loop_header_branch
      %21 = sbr.rel (%p19) target = $region8
    $region5: #{tpu_custom_call.1} parent=1 // loop_body
      %s23 = ssub.s32 %s18, 1
      %s24 = ssub.s32 %s18, 2
      %s31 = sadd.s32 1, %s26
      %p32 = scmp.ge.s32.totalorder %s31, 1
      %s33 = scalar_select %p32, 0, %s31
      %s34 = sadd.s32 1, %s25
      %s35 = scalar_select %p32, %s34, %s25
      %p36 = scmp.ge.s32.totalorder %s35, 2
      %s37 = scalar_select %p36, 0, %s35
      %s38 = ssub.s32 %s25, %s37
      %p39 = scmp.eq.s32.totalorder %s38, 0
      %s41 = sadd.s32 %s40, 1
      %s42 = scalar_select %p39, %s40, %s41
      %p45 = pneg %p39
      %p46 = scmp.eq.s32.totalorder %s18, 1
      %p47 = por %p45, %p46
      %p48 = scmp.ne.s32.totalorder %s40, %s43
      %p49 = scmp.eq.s32.totalorder %s18, 0
      %p50 = por %p48, %p49
      %p51 = scmp.ne.s32.totalorder %s40, %s43
      %p52 = scmp.eq.s32.totalorder %s23, 1
      %p53 = por %p51, %p52
      %p54 = scmp.ne.s32.totalorder %s43, %s44
      %p55 = scmp.eq.s32.totalorder %s23, 0
      %p56 = por %p54, %p55
      %p57 = scmp.ne.s32.totalorder %s43, %s44
      %p58 = scmp.eq.s32.totalorder %s24, 1
      %p59 = por %p57, %p58
      %p61 = scmp.ne.s32.totalorder %s44, %s60
      %p62 = scmp.eq.s32.totalorder %s24, 0
      %p63 = por %p61, %p62
      %s65 = sadd.s32 %s64, 1
      %p68 = scmp.eq.s32.totalorder %s18, 1
      %p69 = scmp.ne.s32.totalorder %s64, %s66
      %p70 = scmp.eq.s32.totalorder %s18, 0
      %p71 = por %p69, %p70
      %p72 = scmp.ne.s32.totalorder %s64, %s66
      %p73 = scmp.eq.s32.totalorder %s23, 1
      %p74 = por %p72, %p73
      %p75 = scmp.ne.s32.totalorder %s66, %s67
      %p76 = scmp.eq.s32.totalorder %s23, 0
      %p77 = por %p75, %p76
      %p78 = scmp.ne.s32.totalorder %s66, %s67
      %p79 = scmp.eq.s32.totalorder %s24, 1
      %p80 = por %p78, %p79
      %p82 = scmp.ne.s32.totalorder %s67, %s81
      %p83 = scmp.eq.s32.totalorder %s24, 0
      %p84 = por %p82, %p83
      %s86 = sadd.s32 %s85, 1
      %p89 = scmp.eq.s32.totalorder %s18, 1
      %p90 = scmp.ne.s32.totalorder %s85, %s87
      %p91 = scmp.eq.s32.totalorder %s18, 0
      %p92 = por %p90, %p91
      %p93 = scmp.ne.s32.totalorder %s85, %s87
      %p94 = scmp.eq.s32.totalorder %s23, 1
      %p95 = por %p93, %p94
      %p96 = scmp.ne.s32.totalorder %s87, %s88
      %p97 = scmp.eq.s32.totalorder %s23, 0
      %p98 = por %p96, %p97
      %p99 = scmp.ne.s32.totalorder %s87, %s88
      %p100 = scmp.eq.s32.totalorder %s24, 1
      %p101 = por %p99, %p100
      %p103 = scmp.ne.s32.totalorder %s88, %s102
      %p104 = scmp.eq.s32.totalorder %s24, 0
      %p105 = por %p103, %p104
      %s107 = sadd.s32 %s106, 1
      %p110 = scmp.eq.s32.totalorder %s18, 1
      %p111 = scmp.ne.s32.totalorder %s106, %s108
      %p112 = scmp.eq.s32.totalorder %s18, 0
      %p113 = por %p111, %p112
      %p114 = scmp.ne.s32.totalorder %s106, %s108
      %p115 = scmp.eq.s32.totalorder %s23, 1
      %p116 = por %p114, %p115
      %p117 = scmp.ne.s32.totalorder %s108, %s109
      %p118 = scmp.eq.s32.totalorder %s23, 0
      %p119 = por %p117, %p118
      %p120 = scmp.ne.s32.totalorder %s108, %s109
      %p121 = scmp.eq.s32.totalorder %s24, 1
      %p122 = por %p120, %p121
      %p124 = scmp.ne.s32.totalorder %s109, %s123
      %p125 = scmp.eq.s32.totalorder %s24, 0
      %p126 = por %p124, %p125
      %s128 = sadd.s32 %s127, 1
      %p131 = scmp.eq.s32.totalorder %s18, 1
      %p132 = scmp.ne.s32.totalorder %s127, %s129
      %p133 = scmp.eq.s32.totalorder %s18, 0
      %p134 = por %p132, %p133
      %p135 = scmp.ne.s32.totalorder %s127, %s129
      %p136 = scmp.eq.s32.totalorder %s23, 1
      %p137 = por %p135, %p136
      %p138 = scmp.ne.s32.totalorder %s129, %s130
      %p139 = scmp.eq.s32.totalorder %s23, 0
      %p140 = por %p138, %p139
      %p141 = scmp.ne.s32.totalorder %s129, %s130
      %p142 = scmp.eq.s32.totalorder %s24, 1
      %p143 = por %p141, %p142
      %p145 = scmp.ne.s32.totalorder %s130, %s144
      %p146 = scmp.eq.s32.totalorder %s24, 0
      %p147 = por %p145, %p146
      %s149 = sadd.s32 %s148, 1
      %p152 = scmp.eq.s32.totalorder %s18, 1
      %p153 = scmp.ne.s32.totalorder %s148, %s150
      %p154 = scmp.eq.s32.totalorder %s18, 0
      %p155 = por %p153, %p154
      %p156 = scmp.ne.s32.totalorder %s148, %s150
      %p157 = scmp.eq.s32.totalorder %s23, 1
      %p158 = por %p156, %p157
      %p159 = scmp.ne.s32.totalorder %s150, %s151
      %p160 = scmp.eq.s32.totalorder %s23, 0
      %p161 = por %p159, %p160
      %p162 = scmp.ne.s32.totalorder %s150, %s151
      %p163 = scmp.eq.s32.totalorder %s24, 1
      %p164 = por %p162, %p163
      %p166 = scmp.ne.s32.totalorder %s151, %s165
      %p167 = scmp.eq.s32.totalorder %s24, 0
      %p168 = por %p166, %p167
      %s170 = sadd.s32 %s169, 1
      %p173 = scmp.eq.s32.totalorder %s18, 1
      %p174 = scmp.ne.s32.totalorder %s169, %s171
      %p175 = scmp.eq.s32.totalorder %s18, 0
      %p176 = por %p174, %p175
      %p177 = scmp.ne.s32.totalorder %s169, %s171
      %p178 = scmp.eq.s32.totalorder %s23, 1
      %p179 = por %p177, %p178
      %p180 = scmp.ne.s32.totalorder %s171, %s172
      %p181 = scmp.eq.s32.totalorder %s23, 0
      %p182 = por %p180, %p181
      %p183 = scmp.ne.s32.totalorder %s171, %s172
      %p184 = scmp.eq.s32.totalorder %s24, 1
      %p185 = por %p183, %p184
      %p187 = scmp.ne.s32.totalorder %s172, %s186
      %p188 = scmp.eq.s32.totalorder %s24, 0
      %p189 = por %p187, %p188
      %s191 = sadd.s32 %s190, 1
      %p194 = scmp.eq.s32.totalorder %s18, 1
      %p195 = scmp.ne.s32.totalorder %s190, %s192
      %p196 = scmp.eq.s32.totalorder %s18, 0
      %p197 = por %p195, %p196
      %p198 = scmp.ne.s32.totalorder %s190, %s192
      %p199 = scmp.eq.s32.totalorder %s23, 1
      %p200 = por %p198, %p199
      %p201 = scmp.ne.s32.totalorder %s192, %s193
      %p202 = scmp.eq.s32.totalorder %s23, 0
      %p203 = por %p201, %p202
      %p204 = scmp.ne.s32.totalorder %s192, %s193
      %p205 = scmp.eq.s32.totalorder %s24, 1
      %p206 = por %p204, %p205
      %p208 = scmp.ne.s32.totalorder %s193, %s207
      %p209 = scmp.eq.s32.totalorder %s24, 0
      %p210 = por %p208, %p209
      %s212 = sadd.s32 %s211, 1
      %p215 = scmp.eq.s32.totalorder %s18, 1
      %p216 = scmp.ne.s32.totalorder %s211, %s213
      %p217 = scmp.eq.s32.totalorder %s18, 0
      %p218 = por %p216, %p217
      %p219 = scmp.ne.s32.totalorder %s211, %s213
      %p220 = scmp.eq.s32.totalorder %s23, 1
      %p221 = por %p219, %p220
      %p222 = scmp.ne.s32.totalorder %s213, %s214
      %p223 = scmp.eq.s32.totalorder %s23, 0
      %p224 = por %p222, %p223
      %p225 = scmp.ne.s32.totalorder %s213, %s214
      %p226 = scmp.eq.s32.totalorder %s24, 1
      %p227 = por %p225, %p226
      %p229 = scmp.ne.s32.totalorder %s214, %s228
      %p230 = scmp.eq.s32.totalorder %s24, 0
      %p231 = por %p229, %p230
      %s232 = ssub.s32 %s25, %s37
      %s233 = ssub.s32 %s26, %s33
      %s234 = sor.u32 %s232, %s233
      %p235 = scmp.eq.s32.totalorder %s234, 0
      %s237 = sadd.s32 %s236, 1
      %s238 = scalar_select %p235, %s236, %s237
      %p241 = pneg %p235
      %p242 = scmp.eq.s32.totalorder %s18, 1
      %p243 = por %p241, %p242
      %p244 = scmp.ne.s32.totalorder %s236, %s239
      %p245 = scmp.eq.s32.totalorder %s18, 0
      %p246 = por %p244, %p245
      %p247 = scmp.ne.s32.totalorder %s236, %s239
      %p248 = scmp.eq.s32.totalorder %s23, 1
      %p249 = por %p247, %p248
      %p250 = scmp.ne.s32.totalorder %s239, %s240
      %p251 = scmp.eq.s32.totalorder %s23, 0
      %p252 = por %p250, %p251
      %p253 = scmp.ne.s32.totalorder %s239, %s240
      %p254 = scmp.eq.s32.totalorder %s24, 1
      %p255 = por %p253, %p254
      %p257 = scmp.ne.s32.totalorder %s240, %s256
      %p258 = scmp.eq.s32.totalorder %s24, 0
      %p259 = por %p257, %p258
      %p260 = scmp.le.s32.totalorder 1, %s18
      %p261 = scmp.lt.s32.totalorder %s18, 3
      %p262 = pnand %p260, %p261
      %p263 = pneg %p262
      // Predicated region
      $region9: #{tpu_custom_call.1} parent=5 // pred_check
        _
      $region10: #{tpu_custom_call.1} parent=5 // pred_check_branch
        %265 = sbr.rel (%p262) target = $region12
      $region11: #{tpu_custom_call.1} parent=5 // pred_region
        %s266 = ssub.s32 %s18, 1
        // Predicated region
        $region13: #{tpu_custom_call.1} parent=11 // pred_check
          %p267 = pneg %p77
        $region14: #{tpu_custom_call.1} parent=11 // pred_check_branch
          %269 = sbr.rel (%p267) target = $region16
        $region15: #{tpu_custom_call.1} parent=11 // pred_region
          _
        $region16: #{tpu_custom_call.1} parent=11 // pred_fallthru
          _
        // Predicated region
        $region17: #{tpu_custom_call.1} parent=11 // pred_check
          %p270 = pneg %p98
        $region18: #{tpu_custom_call.1} parent=11 // pred_check_branch
          %272 = sbr.rel (%p270) target = $region20
        $region19: #{tpu_custom_call.1} parent=11 // pred_region
          _
        $region20: #{tpu_custom_call.1} parent=11 // pred_fallthru
          _
        // Predicated region
        $region21: #{tpu_custom_call.1} parent=11 // pred_check
          %p273 = pneg %p119
        $region22: #{tpu_custom_call.1} parent=11 // pred_check_branch
          %275 = sbr.rel (%p273) target = $region24
        $region23: #{tpu_custom_call.1} parent=11 // pred_region
          _
        $region24: #{tpu_custom_call.1} parent=11 // pred_fallthru
          _
        // Predicated region
        $region25: #{tpu_custom_call.1} parent=11 // pred_check
          %p276 = pneg %p140
        $region26: #{tpu_custom_call.1} parent=11 // pred_check_branch
          %278 = sbr.rel (%p276) target = $region28
        $region27: #{tpu_custom_call.1} parent=11 // pred_region
          _
        $region28: #{tpu_custom_call.1} parent=11 // pred_fallthru
          _
        // Predicated region
        $region29: #{tpu_custom_call.1} parent=11 // pred_check
          %p279 = pneg %p161
        $region30: #{tpu_custom_call.1} parent=11 // pred_check_branch
          %281 = sbr.rel (%p279) target = $region32
        $region31: #{tpu_custom_call.1} parent=11 // pred_region
          _
        $region32: #{tpu_custom_call.1} parent=11 // pred_fallthru
          _
        // Predicated region
        $region33: #{tpu_custom_call.1} parent=11 // pred_check
          %p282 = pneg %p182
        $region34: #{tpu_custom_call.1} parent=11 // pred_check_branch
          %284 = sbr.rel (%p282) target = $region36
        $region35: #{tpu_custom_call.1} parent=11 // pred_region
          _
        $region36: #{tpu_custom_call.1} parent=11 // pred_fallthru
          _
        // Predicated region
        $region37: #{tpu_custom_call.1} parent=11 // pred_check
          %p285 = pneg %p203
        $region38: #{tpu_custom_call.1} parent=11 // pred_check_branch
          %287 = sbr.rel (%p285) target = $region40
        $region39: #{tpu_custom_call.1} parent=11 // pred_region
          _
        $region40: #{tpu_custom_call.1} parent=11 // pred_fallthru
          _
        // Predicated region
        $region41: #{tpu_custom_call.1} parent=11 // pred_check
          %p288 = pneg %p224
        $region42: #{tpu_custom_call.1} parent=11 // pred_check_branch
          %290 = sbr.rel (%p288) target = $region44
        $region43: #{tpu_custom_call.1} parent=11 // pred_region
          _
        $region44: #{tpu_custom_call.1} parent=11 // pred_fallthru
          _
      $region12: #{tpu_custom_call.1} parent=5 // pred_fallthru
        _
      %p291 = scmp.lt.s32.totalorder %s18, 2
      // Predicated region
      $region45: #{tpu_custom_call.1} parent=5 // pred_check
        %p292 = pneg %p291
      $region46: #{tpu_custom_call.1} parent=5 // pred_check_branch
        %294 = sbr.rel (%p292) target = $region48
      $region47: #{tpu_custom_call.1} parent=5 // pred_region
        // Predicated region
        $region49: #{tpu_custom_call.1} parent=47 // pred_check
          %p295 = pneg %p50
        $region50: #{tpu_custom_call.1} parent=47 // pred_check_branch
          %297 = sbr.rel (%p295) target = $region52
        $region51: #{tpu_custom_call.1} parent=47 // pred_region
          %p298 = scmp.lt.s32.totalorder %s25, 1
          %s299 = scalar_select %p298, %s25, 1
          %s300 = smul.addr %s299, 8
          %s301 = scalar_lea.vmem %s0, %s300
        $region52: #{tpu_custom_call.1} parent=47 // pred_fallthru
          _
      $region48: #{tpu_custom_call.1} parent=5 // pred_fallthru
        _
      %p302 = scmp.le.s32.totalorder 1, %s18
      %p303 = scmp.lt.s32.totalorder %s18, 3
      %p304 = pnand %p302, %p303
      %p305 = pneg %p304
      // Predicated region
      $region53: #{tpu_custom_call.1} parent=5 // pred_check
        _
      $region54: #{tpu_custom_call.1} parent=5 // pred_check_branch
        %307 = sbr.rel (%p304) target = $region56
      $region55: #{tpu_custom_call.1} parent=5 // pred_region
        %s308 = ssub.s32 %s18, 1
        %p309 = scmp.lt.s32.totalorder %s27, 1
        %s310 = scalar_select %p309, %s27, 1
        %s311 = smul.addr %s310, 8
        %s312 = scalar_lea.vmem %s0, %s311
        %p313 = pneg %p56
        %p314 = pneg %p53
        %p315 = pneg %p77
        %p316 = pneg %p74
        %p317 = pneg %p98
        %p318 = pneg %p95
        %p319 = pneg %p119
        %p320 = pneg %p116
        %p321 = pneg %p140
        %p322 = pneg %p137
        %p323 = pneg %p161
        %p324 = pneg %p158
        %p325 = pneg %p182
        %p326 = pneg %p179
        %p327 = pneg %p203
        %p328 = pneg %p200
        %p329 = pneg %p224
        %p330 = pneg %p221
        %p331 = pneg %p252
        %p332 = pneg %p249
        %s333 = sand.u32 %s239, 1
        %s334 = scalar_lea.sflag [#allocation6], %s333
        %s335 = sand.u32 %s239, 1
        %s336 = smul.addr %s335, 8
        %s337 = scalar_lea.vmem [#allocation5], %s336
        %p338 = scmp.lt.s32.totalorder %s27, 1
        %s339 = scalar_select %p338, %s27, 1
        %s340 = smul.addr %s339, 8
        %s341 = scalar_lea.vmem %s0, %s340
        %p342 = scmp.eq.s32.totalorder %s28, 0
        // Predicated region
        $region57: #{tpu_custom_call.1} parent=55 // pred_check
          %p343 = pneg %p342
        $region58: #{tpu_custom_call.1} parent=55 // pred_check_branch
          %345 = sbr.rel (%p343) target = $region60
        $region59: #{tpu_custom_call.1} parent=55 // pred_region
          %v346 = vld [vmem:[%s341] sm:$0xff]
          %v347 = vld [vmem:[%s3] sm:$0xff]
          %v348 = vld [vmem:[%s3 + $0x8] sm:$0xff]
          %v349 = vld [vmem:[%s3 + $0x10] sm:$0xff]
          %v350 = vld [vmem:[%s3 + $0x18] sm:$0xff]
          %v351 = vld [vmem:[%s4] sm:$0x1]
          %v353 = vlaneseq
          %v354 = vshrl.u32 %v353, 7
          %v355 = vsub.s32 0, %v354
          %v356 = vrot.slane %v351, %v355
          %vm358 = vcmask 261120
          %v360 = vsel %vm358, %v346, 0
          %362 = vmatprep.subr.mxu0 0.0
          %363 = vmatpush1.msra.mxu0 %v347
          %364 = vmatprep.subr.mxu0 0.0
          %365 = vmatpush1.msra.mxu0 %v348
          %366 = vmatprep.subr.mxu0 0.0
          %367 = vmatpush1.msra.mxu0 %v349
          %368 = vmatprep.subr.mxu0 0.0
          %369 = vmatpush1.msra.mxu0 %v350
          %370 = vmatprep.subr.mxu0 0.0
          %371 = vmatpush1.msra.mxu0 0.0
          %372 = vmatprep.subr.mxu0 0.0
          %373 = vmatpush1.msra.mxu0 0.0
          %374 = vmatprep.subr.mxu0 0.0
          %375 = vmatpush1.msra.mxu0 0.0
          %376 = vmatprep.subr.mxu0 0.0
          %377 = vmatpush1.msra.mxu0 0.0
          %378 = vmatprep.subr.mxu0 0.0
          %379 = vmatpush1.msra.mxu0 0.0
          %380 = vmatprep.subr.mxu0 0.0
          %381 = vmatpush1.msra.mxu0 0.0
          %382 = vmatprep.subr.mxu0 0.0
          %383 = vmatpush1.msra.mxu0 0.0
          %384 = vmatprep.subr.mxu0 0.0
          %385 = vmatpush1.msra.mxu0 0.0
          %386 = vmatprep.subr.mxu0 0.0
          %387 = vmatpush1.msra.mxu0 0.0
          %388 = vmatprep.subr.mxu0 0.0
          %389 = vmatpush1.msra.mxu0 0.0
          %390 = vmatprep.subr.mxu0 0.0
          %391 = vmatpush1.msra.mxu0 0.0
          %392 = vmatprep.subr.mxu0 0.0
          %393 = vmatpush1.msra.mxu0 0.0
          %394 = vmatprep.subr.mxu0 0.0
          %395 = vmatpush1.msra.mxu0 0.0
          %396 = vmatprep.subr.mxu0 0.0
          %397 = vmatpush1.msra.mxu0 0.0
          %398 = vmatprep.subr.mxu0 0.0
          %399 = vmatpush1.msra.mxu0 0.0
          %400 = vmatprep.subr.mxu0 0.0
          %401 = vmatpush1.msra.mxu0 0.0
          %402 = vmatprep.subr.mxu0 0.0
          %403 = vmatpush1.msra.mxu0 0.0
          %404 = vmatprep.subr.mxu0 0.0
          %405 = vmatpush1.msra.mxu0 0.0
          %406 = vmatprep.subr.mxu0 0.0
          %407 = vmatpush1.msra.mxu0 0.0
          %408 = vmatprep.subr.mxu0 0.0
          %409 = vmatpush1.msra.mxu0 0.0
          %410 = vmatprep.subr.mxu0 0.0
          %411 = vmatpush1.msra.mxu0 0.0
          %412 = vmatprep.subr.mxu0 0.0
          %413 = vmatpush1.msra.mxu0 0.0
          %414 = vmatprep.subr.mxu0 0.0
          %415 = vmatpush1.msra.mxu0 0.0
          %416 = vmatprep.subr.mxu0 0.0
          %417 = vmatpush1.msra.mxu0 0.0
          %418 = vmatprep.subr.mxu0 0.0
          %419 = vmatpush1.msra.mxu0 0.0
          %420 = vmatprep.subr.mxu0 0.0
          %421 = vmatpush1.msra.mxu0 0.0
          %422 = vmatprep.subr.mxu0 0.0
          %423 = vmatpush1.msra.mxu0 0.0
          %424 = vmatprep.subr.mxu0 0.0
          %425 = vmatpush1.msra.mxu0 0.0
          %426 = vmatprep.mubr.f32.mxu0 0.0
          %427 = vmatmul.mubr.f32.gmra.mrb[0].mxu0 %v360
          %v428 = vpop.f32.mrb[0].mxu0
          %v429 = vadd.f32 %v356, %v428
          %v430 = vpop.f32.mrb[0].mxu0
          %431 = vdwg.mxu0
          %vm432 = vcmask 64512
          %433 = vst.msk [vmem:[#allocation2] sm:$0xff] %vm432, %v429
          %v434 = vld [vmem:[%s5] sm:$0xff]
          %v435 = vld [vmem:[%s5 + $0x8] sm:$0xff]
          %v436 = vld [vmem:[%s5 + $0x10] sm:$0xff]
          %v437 = vld [vmem:[%s5 + $0x18] sm:$0xff]
          %v438 = vld [vmem:[%s6] sm:$0x1]
          %v440 = vlaneseq
          %v441 = vshrl.u32 %v440, 7
          %v442 = vsub.s32 0, %v441
          %v443 = vrot.slane %v438, %v442
          %445 = vmatprep.subr.mxu0 0.0
          %446 = vmatpush1.msra.mxu0 %v434
          %447 = vmatprep.subr.mxu0 0.0
          %448 = vmatpush1.msra.mxu0 %v435
          %449 = vmatprep.subr.mxu0 0.0
          %450 = vmatpush1.msra.mxu0 %v436
          %451 = vmatprep.subr.mxu0 0.0
          %452 = vmatpush1.msra.mxu0 %v437
          %453 = vmatprep.subr.mxu0 0.0
          %454 = vmatpush1.msra.mxu0 0.0
          %455 = vmatprep.subr.mxu0 0.0
          %456 = vmatpush1.msra.mxu0 0.0
          %457 = vmatprep.subr.mxu0 0.0
          %458 = vmatpush1.msra.mxu0 0.0
          %459 = vmatprep.subr.mxu0 0.0
          %460 = vmatpush1.msra.mxu0 0.0
          %461 = vmatprep.subr.mxu0 0.0
          %462 = vmatpush1.msra.mxu0 0.0
          %463 = vmatprep.subr.mxu0 0.0
          %464 = vmatpush1.msra.mxu0 0.0
          %465 = vmatprep.subr.mxu0 0.0
          %466 = vmatpush1.msra.mxu0 0.0
          %467 = vmatprep.subr.mxu0 0.0
          %468 = vmatpush1.msra.mxu0 0.0
          %469 = vmatprep.subr.mxu0 0.0
          %470 = vmatpush1.msra.mxu0 0.0
          %471 = vmatprep.subr.mxu0 0.0
          %472 = vmatpush1.msra.mxu0 0.0
          %473 = vmatprep.subr.mxu0 0.0
          %474 = vmatpush1.msra.mxu0 0.0
          %475 = vmatprep.subr.mxu0 0.0
          %476 = vmatpush1.msra.mxu0 0.0
          %477 = vmatprep.subr.mxu0 0.0
          %478 = vmatpush1.msra.mxu0 0.0
          %479 = vmatprep.subr.mxu0 0.0
          %480 = vmatpush1.msra.mxu0 0.0
          %481 = vmatprep.subr.mxu0 0.0
          %482 = vmatpush1.msra.mxu0 0.0
          %483 = vmatprep.subr.mxu0 0.0
          %484 = vmatpush1.msra.mxu0 0.0
          %485 = vmatprep.subr.mxu0 0.0
          %486 = vmatpush1.msra.mxu0 0.0
          %487 = vmatprep.subr.mxu0 0.0
          %488 = vmatpush1.msra.mxu0 0.0
          %489 = vmatprep.subr.mxu0 0.0
          %490 = vmatpush1.msra.mxu0 0.0
          %491 = vmatprep.subr.mxu0 0.0
          %492 = vmatpush1.msra.mxu0 0.0
          %493 = vmatprep.subr.mxu0 0.0
          %494 = vmatpush1.msra.mxu0 0.0
          %495 = vmatprep.subr.mxu0 0.0
          %496 = vmatpush1.msra.mxu0 0.0
          %497 = vmatprep.subr.mxu0 0.0
          %498 = vmatpush1.msra.mxu0 0.0
          %499 = vmatprep.subr.mxu0 0.0
          %500 = vmatpush1.msra.mxu0 0.0
          %501 = vmatprep.subr.mxu0 0.0
          %502 = vmatpush1.msra.mxu0 0.0
          %503 = vmatprep.subr.mxu0 0.0
          %504 = vmatpush1.msra.mxu0 0.0
          %505 = vmatprep.subr.mxu0 0.0
          %506 = vmatpush1.msra.mxu0 0.0
          %507 = vmatprep.subr.mxu0 0.0
          %508 = vmatpush1.msra.mxu0 0.0
          %509 = vmatprep.mubr.f32.mxu0 0.0
          %510 = vmatmul.mubr.f32.gmra.mrb[0].mxu0 %v360
          %v511 = vpop.f32.mrb[0].mxu0
          %v512 = vadd.f32 %v443, %v511
          %v513 = vpop.f32.mrb[0].mxu0
          %514 = vdwg.mxu0
          %515 = vst.msk [vmem:[#allocation3] sm:$0xff] %vm432, %v512
          %s516 = scalar_lea.vmem %s3, 32
          %v517 = vld [vmem:[%s516] sm:$0xff]
          %v518 = vld [vmem:[%s516 + $0x8] sm:$0xff]
          %v519 = vld [vmem:[%s516 + $0x10] sm:$0xff]
          %v520 = vld [vmem:[%s516 + $0x18] sm:$0xff]
          %s521 = scalar_lea.vmem %s4, 1
          %v522 = vld [vmem:[%s521] sm:$0x1]
          %v524 = vlaneseq
          %v525 = vshrl.u32 %v524, 7
          %v526 = vsub.s32 0, %v525
          %v527 = vrot.slane %v522, %v526
          %529 = vmatprep.subr.mxu0 0.0
          %530 = vmatpush1.msra.mxu0 %v517
          %531 = vmatprep.subr.mxu0 0.0
          %532 = vmatpush1.msra.mxu0 %v518
          %533 = vmatprep.subr.mxu0 0.0
          %534 = vmatpush1.msra.mxu0 %v519
          %535 = vmatprep.subr.mxu0 0.0
          %536 = vmatpush1.msra.mxu0 %v520
          %537 = vmatprep.subr.mxu0 0.0
          %538 = vmatpush1.msra.mxu0 0.0
          %539 = vmatprep.subr.mxu0 0.0
          %540 = vmatpush1.msra.mxu0 0.0
          %541 = vmatprep.subr.mxu0 0.0
          %542 = vmatpush1.msra.mxu0 0.0
          %543 = vmatprep.subr.mxu0 0.0
          %544 = vmatpush1.msra.mxu0 0.0
          %545 = vmatprep.subr.mxu0 0.0
          %546 = vmatpush1.msra.mxu0 0.0
          %547 = vmatprep.subr.mxu0 0.0
          %548 = vmatpush1.msra.mxu0 0.0
          %549 = vmatprep.subr.mxu0 0.0
          %550 = vmatpush1.msra.mxu0 0.0
          %551 = vmatprep.subr.mxu0 0.0
          %552 = vmatpush1.msra.mxu0 0.0
          %553 = vmatprep.subr.mxu0 0.0
          %554 = vmatpush1.msra.mxu0 0.0
          %555 = vmatprep.subr.mxu0 0.0
          %556 = vmatpush1.msra.mxu0 0.0
          %557 = vmatprep.subr.mxu0 0.0
          %558 = vmatpush1.msra.mxu0 0.0
          %559 = vmatprep.subr.mxu0 0.0
          %560 = vmatpush1.msra.mxu0 0.0
          %561 = vmatprep.subr.mxu0 0.0
          %562 = vmatpush1.msra.mxu0 0.0
          %563 = vmatprep.subr.mxu0 0.0
          %564 = vmatpush1.msra.mxu0 0.0
          %565 = vmatprep.subr.mxu0 0.0
          %566 = vmatpush1.msra.mxu0 0.0
          %567 = vmatprep.subr.mxu0 0.0
          %568 = vmatpush1.msra.mxu0 0.0
          %569 = vmatprep.subr.mxu0 0.0
          %570 = vmatpush1.msra.mxu0 0.0
          %571 = vmatprep.subr.mxu0 0.0
          %572 = vmatpush1.msra.mxu0 0.0
          %573 = vmatprep.subr.mxu0 0.0
          %574 = vmatpush1.msra.mxu0 0.0
          %575 = vmatprep.subr.mxu0 0.0
          %576 = vmatpush1.msra.mxu0 0.0
          %577 = vmatprep.subr.mxu0 0.0
          %578 = vmatpush1.msra.mxu0 0.0
          %579 = vmatprep.subr.mxu0 0.0
          %580 = vmatpush1.msra.mxu0 0.0
          %581 = vmatprep.subr.mxu0 0.0
          %582 = vmatpush1.msra.mxu0 0.0
          %583 = vmatprep.subr.mxu0 0.0
          %584 = vmatpush1.msra.mxu0 0.0
          %585 = vmatprep.subr.mxu0 0.0
          %586 = vmatpush1.msra.mxu0 0.0
          %587 = vmatprep.subr.mxu0 0.0
          %588 = vmatpush1.msra.mxu0 0.0
          %589 = vmatprep.subr.mxu0 0.0
          %590 = vmatpush1.msra.mxu0 0.0
          %591 = vmatprep.subr.mxu0 0.0
          %592 = vmatpush1.msra.mxu0 0.0
          %593 = vmatprep.mubr.f32.mxu0 0.0
          %594 = vmatmul.mubr.f32.gmra.mrb[0].mxu0 %v360
          %v595 = vpop.f32.mrb[0].mxu0
          %v596 = vadd.f32 %v527, %v595
          %v597 = vpop.f32.mrb[0].mxu0
          %598 = vdwg.mxu0
          %s599 = scalar_lea.vmem [#allocation2], 8
          %600 = vst.msk [vmem:[%s599] sm:$0xff] %vm432, %v596
          %s601 = scalar_lea.vmem %s5, 32
          %v602 = vld [vmem:[%s601] sm:$0xff]
          %v603 = vld [vmem:[%s601 + $0x8] sm:$0xff]
          %v604 = vld [vmem:[%s601 + $0x10] sm:$0xff]
          %v605 = vld [vmem:[%s601 + $0x18] sm:$0xff]
          %s606 = scalar_lea.vmem %s6, 1
          %v607 = vld [vmem:[%s606] sm:$0x1]
          %v609 = vlaneseq
          %v610 = vshrl.u32 %v609, 7
          %v611 = vsub.s32 0, %v610
          %v612 = vrot.slane %v607, %v611
          %614 = vmatprep.subr.mxu0 0.0
          %615 = vmatpush1.msra.mxu0 %v602
          %616 = vmatprep.subr.mxu0 0.0
          %617 = vmatpush1.msra.mxu0 %v603
          %618 = vmatprep.subr.mxu0 0.0
          %619 = vmatpush1.msra.mxu0 %v604
          %620 = vmatprep.subr.mxu0 0.0
          %621 = vmatpush1.msra.mxu0 %v605
          %622 = vmatprep.subr.mxu0 0.0
          %623 = vmatpush1.msra.mxu0 0.0
          %624 = vmatprep.subr.mxu0 0.0
          %625 = vmatpush1.msra.mxu0 0.0
          %626 = vmatprep.subr.mxu0 0.0
          %627 = vmatpush1.msra.mxu0 0.0
          %628 = vmatprep.subr.mxu0 0.0
          %629 = vmatpush1.msra.mxu0 0.0
          %630 = vmatprep.subr.mxu0 0.0
          %631 = vmatpush1.msra.mxu0 0.0
          %632 = vmatprep.subr.mxu0 0.0
          %633 = vmatpush1.msra.mxu0 0.0
          %634 = vmatprep.subr.mxu0 0.0
          %635 = vmatpush1.msra.mxu0 0.0
          %636 = vmatprep.subr.mxu0 0.0
          %637 = vmatpush1.msra.mxu0 0.0
          %638 = vmatprep.subr.mxu0 0.0
          %639 = vmatpush1.msra.mxu0 0.0
          %640 = vmatprep.subr.mxu0 0.0
          %641 = vmatpush1.msra.mxu0 0.0
          %642 = vmatprep.subr.mxu0 0.0
          %643 = vmatpush1.msra.mxu0 0.0
          %644 = vmatprep.subr.mxu0 0.0
          %645 = vmatpush1.msra.mxu0 0.0
          %646 = vmatprep.subr.mxu0 0.0
          %647 = vmatpush1.msra.mxu0 0.0
          %648 = vmatprep.subr.mxu0 0.0
          %649 = vmatpush1.msra.mxu0 0.0
          %650 = vmatprep.subr.mxu0 0.0
          %651 = vmatpush1.msra.mxu0 0.0
          %652 = vmatprep.subr.mxu0 0.0
          %653 = vmatpush1.msra.mxu0 0.0
          %654 = vmatprep.subr.mxu0 0.0
          %655 = vmatpush1.msra.mxu0 0.0
          %656 = vmatprep.subr.mxu0 0.0
          %657 = vmatpush1.msra.mxu0 0.0
          %658 = vmatprep.subr.mxu0 0.0
          %659 = vmatpush1.msra.mxu0 0.0
          %660 = vmatprep.subr.mxu0 0.0
          %661 = vmatpush1.msra.mxu0 0.0
          %662 = vmatprep.subr.mxu0 0.0
          %663 = vmatpush1.msra.mxu0 0.0
          %664 = vmatprep.subr.mxu0 0.0
          %665 = vmatpush1.msra.mxu0 0.0
          %666 = vmatprep.subr.mxu0 0.0
          %667 = vmatpush1.msra.mxu0 0.0
          %668 = vmatprep.subr.mxu0 0.0
          %669 = vmatpush1.msra.mxu0 0.0
          %670 = vmatprep.subr.mxu0 0.0
          %671 = vmatpush1.msra.mxu0 0.0
          %672 = vmatprep.subr.mxu0 0.0
          %673 = vmatpush1.msra.mxu0 0.0
          %674 = vmatprep.subr.mxu0 0.0
          %675 = vmatpush1.msra.mxu0 0.0
          %676 = vmatprep.subr.mxu0 0.0
          %677 = vmatpush1.msra.mxu0 0.0
          %678 = vmatprep.mubr.f32.mxu0 0.0
          %679 = vmatmul.mubr.f32.gmra.mrb[0].mxu0 %v360
          %v680 = vpop.f32.mrb[0].mxu0
          %v681 = vadd.f32 %v612, %v680
          %v682 = vpop.f32.mrb[0].mxu0
          %683 = vdwg.mxu0
          %s684 = scalar_lea.vmem [#allocation3], 8
          %685 = vst.msk [vmem:[%s684] sm:$0xff] %vm432, %v681
          %s686 = scalar_lea.vmem %s3, 64
          %v687 = vld [vmem:[%s686] sm:$0xff]
          %v688 = vld [vmem:[%s686 + $0x8] sm:$0xff]
          %v689 = vld [vmem:[%s686 + $0x10] sm:$0xff]
          %v690 = vld [vmem:[%s686 + $0x18] sm:$0xff]
          %s691 = scalar_lea.vmem %s4, 2
          %v692 = vld [vmem:[%s691] sm:$0x1]
          %v694 = vlaneseq
          %v695 = vshrl.u32 %v694, 7
          %v696 = vsub.s32 0, %v695
          %v697 = vrot.slane %v692, %v696
          %699 = vmatprep.subr.mxu0 0.0
          %700 = vmatpush1.msra.mxu0 %v687
          %701 = vmatprep.subr.mxu0 0.0
          %702 = vmatpush1.msra.mxu0 %v688
          %703 = vmatprep.subr.mxu0 0.0
          %704 = vmatpush1.msra.mxu0 %v689
          %705 = vmatprep.subr.mxu0 0.0
          %706 = vmatpush1.msra.mxu0 %v690
          %707 = vmatprep.subr.mxu0 0.0
          %708 = vmatpush1.msra.mxu0 0.0
          %709 = vmatprep.subr.mxu0 0.0
          %710 = vmatpush1.msra.mxu0 0.0
          %711 = vmatprep.subr.mxu0 0.0
          %712 = vmatpush1.msra.mxu0 0.0
          %713 = vmatprep.subr.mxu0 0.0
          %714 = vmatpush1.msra.mxu0 0.0
          %715 = vmatprep.subr.mxu0 0.0
          %716 = vmatpush1.msra.mxu0 0.0
          %717 = vmatprep.subr.mxu0 0.0
          %718 = vmatpush1.msra.mxu0 0.0
          %719 = vmatprep.subr.mxu0 0.0
          %720 = vmatpush1.msra.mxu0 0.0
          %721 = vmatprep.subr.mxu0 0.0
          %722 = vmatpush1.msra.mxu0 0.0
          %723 = vmatprep.subr.mxu0 0.0
          %724 = vmatpush1.msra.mxu0 0.0
          %725 = vmatprep.subr.mxu0 0.0
          %726 = vmatpush1.msra.mxu0 0.0
          %727 = vmatprep.subr.mxu0 0.0
          %728 = vmatpush1.msra.mxu0 0.0
          %729 = vmatprep.subr.mxu0 0.0
          %730 = vmatpush1.msra.mxu0 0.0
          %731 = vmatprep.subr.mxu0 0.0
          %732 = vmatpush1.msra.mxu0 0.0
          %733 = vmatprep.subr.mxu0 0.0
          %734 = vmatpush1.msra.mxu0 0.0
          %735 = vmatprep.subr.mxu0 0.0
          %736 = vmatpush1.msra.mxu0 0.0
          %737 = vmatprep.subr.mxu0 0.0
          %738 = vmatpush1.msra.mxu0 0.0
          %739 = vmatprep.subr.mxu0 0.0
          %740 = vmatpush1.msra.mxu0 0.0
          %741 = vmatprep.subr.mxu0 0.0
          %742 = vmatpush1.msra.mxu0 0.0
          %743 = vmatprep.subr.mxu0 0.0
          %744 = vmatpush1.msra.mxu0 0.0
          %745 = vmatprep.subr.mxu0 0.0
          %746 = vmatpush1.msra.mxu0 0.0
          %747 = vmatprep.subr.mxu0 0.0
          %748 = vmatpush1.msra.mxu0 0.0
          %749 = vmatprep.subr.mxu0 0.0
          %750 = vmatpush1.msra.mxu0 0.0
          %751 = vmatprep.subr.mxu0 0.0
          %752 = vmatpush1.msra.mxu0 0.0
          %753 = vmatprep.subr.mxu0 0.0
          %754 = vmatpush1.msra.mxu0 0.0
          %755 = vmatprep.subr.mxu0 0.0
          %756 = vmatpush1.msra.mxu0 0.0
          %757 = vmatprep.subr.mxu0 0.0
          %758 = vmatpush1.msra.mxu0 0.0
          %759 = vmatprep.subr.mxu0 0.0
          %760 = vmatpush1.msra.mxu0 0.0
          %761 = vmatprep.subr.mxu0 0.0
          %762 = vmatpush1.msra.mxu0 0.0
          %763 = vmatprep.mubr.f32.mxu0 0.0
          %764 = vmatmul.mubr.f32.gmra.mrb[0].mxu0 %v360
          %v765 = vpop.f32.mrb[0].mxu0
          %v766 = vadd.f32 %v697, %v765
          %v767 = vpop.f32.mrb[0].mxu0
          %768 = vdwg.mxu0
          %s769 = scalar_lea.vmem [#allocation2], 16
          %770 = vst.msk [vmem:[%s769] sm:$0xff] %vm432, %v766
          %s771 = scalar_lea.vmem %s5, 64
          %v772 = vld [vmem:[%s771] sm:$0xff]
          %v773 = vld [vmem:[%s771 + $0x8] sm:$0xff]
          %v774 = vld [vmem:[%s771 + $0x10] sm:$0xff]
          %v775 = vld [vmem:[%s771 + $0x18] sm:$0xff]
          %s776 = scalar_lea.vmem %s6, 2
          %v777 = vld [vmem:[%s776] sm:$0x1]
          %v779 = vlaneseq
          %v780 = vshrl.u32 %v779, 7
          %v781 = vsub.s32 0, %v780
          %v782 = vrot.slane %v777, %v781
          %784 = vmatprep.subr.mxu0 0.0
          %785 = vmatpush1.msra.mxu0 %v772
          %786 = vmatprep.subr.mxu0 0.0
          %787 = vmatpush1.msra.mxu0 %v773
          %788 = vmatprep.subr.mxu0 0.0
          %789 = vmatpush1.msra.mxu0 %v774
          %790 = vmatprep.subr.mxu0 0.0
          %791 = vmatpush1.msra.mxu0 %v775
          %792 = vmatprep.subr.mxu0 0.0
          %793 = vmatpush1.msra.mxu0 0.0
          %794 = vmatprep.subr.mxu0 0.0
          %795 = vmatpush1.msra.mxu0 0.0
          %796 = vmatprep.subr.mxu0 0.0
          %797 = vmatpush1.msra.mxu0 0.0
          %798 = vmatprep.subr.mxu0 0.0
          %799 = vmatpush1.msra.mxu0 0.0
          %800 = vmatprep.subr.mxu0 0.0
          %801 = vmatpush1.msra.mxu0 0.0
          %802 = vmatprep.subr.mxu0 0.0
          %803 = vmatpush1.msra.mxu0 0.0
          %804 = vmatprep.subr.mxu0 0.0
          %805 = vmatpush1.msra.mxu0 0.0
          %806 = vmatprep.subr.mxu0 0.0
          %807 = vmatpush1.msra.mxu0 0.0
          %808 = vmatprep.subr.mxu0 0.0
          %809 = vmatpush1.msra.mxu0 0.0
          %810 = vmatprep.subr.mxu0 0.0
          %811 = vmatpush1.msra.mxu0 0.0
          %812 = vmatprep.subr.mxu0 0.0
          %813 = vmatpush1.msra.mxu0 0.0
          %814 = vmatprep.subr.mxu0 0.0
          %815 = vmatpush1.msra.mxu0 0.0
          %816 = vmatprep.subr.mxu0 0.0
          %817 = vmatpush1.msra.mxu0 0.0
          %818 = vmatprep.subr.mxu0 0.0
          %819 = vmatpush1.msra.mxu0 0.0
          %820 = vmatprep.subr.mxu0 0.0
          %821 = vmatpush1.msra.mxu0 0.0
          %822 = vmatprep.subr.mxu0 0.0
          %823 = vmatpush1.msra.mxu0 0.0
          %824 = vmatprep.subr.mxu0 0.0
          %825 = vmatpush1.msra.mxu0 0.0
          %826 = vmatprep.subr.mxu0 0.0
          %827 = vmatpush1.msra.mxu0 0.0
          %828 = vmatprep.subr.mxu0 0.0
          %829 = vmatpush1.msra.mxu0 0.0
          %830 = vmatprep.subr.mxu0 0.0
          %831 = vmatpush1.msra.mxu0 0.0
          %832 = vmatprep.subr.mxu0 0.0
          %833 = vmatpush1.msra.mxu0 0.0
          %834 = vmatprep.subr.mxu0 0.0
          %835 = vmatpush1.msra.mxu0 0.0
          %836 = vmatprep.subr.mxu0 0.0
          %837 = vmatpush1.msra.mxu0 0.0
          %838 = vmatprep.subr.mxu0 0.0
          %839 = vmatpush1.msra.mxu0 0.0
          %840 = vmatprep.subr.mxu0 0.0
          %841 = vmatpush1.msra.mxu0 0.0
          %842 = vmatprep.subr.mxu0 0.0
          %843 = vmatpush1.msra.mxu0 0.0
          %844 = vmatprep.subr.mxu0 0.0
          %845 = vmatpush1.msra.mxu0 0.0
          %846 = vmatprep.subr.mxu0 0.0
          %847 = vmatpush1.msra.mxu0 0.0
          %848 = vmatprep.mubr.f32.mxu0 0.0
          %849 = vmatmul.mubr.f32.gmra.mrb[0].mxu0 %v360
          %v850 = vpop.f32.mrb[0].mxu0
          %v851 = vadd.f32 %v782, %v850
          %v852 = vpop.f32.mrb[0].mxu0
          %853 = vdwg.mxu0
          %s854 = scalar_lea.vmem [#allocation3], 16
          %855 = vst.msk [vmem:[%s854] sm:$0xff] %vm432, %v851
          %s856 = scalar_lea.vmem %s3, 96
          %v857 = vld [vmem:[%s856] sm:$0xff]
          %v858 = vld [vmem:[%s856 + $0x8] sm:$0xff]
          %v859 = vld [vmem:[%s856 + $0x10] sm:$0xff]
          %v860 = vld [vmem:[%s856 + $0x18] sm:$0xff]
          %s861 = scalar_lea.vmem %s4, 3
          %v862 = vld [vmem:[%s861] sm:$0x1]
          %v864 = vlaneseq
          %v865 = vshrl.u32 %v864, 7
          %v866 = vsub.s32 0, %v865
          %v867 = vrot.slane %v862, %v866
          %869 = vmatprep.subr.mxu0 0.0
          %870 = vmatpush1.msra.mxu0 %v857
          %871 = vmatprep.subr.mxu0 0.0
          %872 = vmatpush1.msra.mxu0 %v858
          %873 = vmatprep.subr.mxu0 0.0
          %874 = vmatpush1.msra.mxu0 %v859
          %875 = vmatprep.subr.mxu0 0.0
          %876 = vmatpush1.msra.mxu0 %v860
          %877 = vmatprep.subr.mxu0 0.0
          %878 = vmatpush1.msra.mxu0 0.0
          %879 = vmatprep.subr.mxu0 0.0
          %880 = vmatpush1.msra.mxu0 0.0
          %881 = vmatprep.subr.mxu0 0.0
          %882 = vmatpush1.msra.mxu0 0.0
          %883 = vmatprep.subr.mxu0 0.0
          %884 = vmatpush1.msra.mxu0 0.0
          %885 = vmatprep.subr.mxu0 0.0
          %886 = vmatpush1.msra.mxu0 0.0
          %887 = vmatprep.subr.mxu0 0.0
          %888 = vmatpush1.msra.mxu0 0.0
          %889 = vmatprep.subr.mxu0 0.0
          %890 = vmatpush1.msra.mxu0 0.0
          %891 = vmatprep.subr.mxu0 0.0
          %892 = vmatpush1.msra.mxu0 0.0
          %893 = vmatprep.subr.mxu0 0.0
          %894 = vmatpush1.msra.mxu0 0.0
          %895 = vmatprep.subr.mxu0 0.0
          %896 = vmatpush1.msra.mxu0 0.0
          %897 = vmatprep.subr.mxu0 0.0
          %898 = vmatpush1.msra.mxu0 0.0
          %899 = vmatprep.subr.mxu0 0.0
          %900 = vmatpush1.msra.mxu0 0.0
          %901 = vmatprep.subr.mxu0 0.0
          %902 = vmatpush1.msra.mxu0 0.0
          %903 = vmatprep.subr.mxu0 0.0
          %904 = vmatpush1.msra.mxu0 0.0
          %905 = vmatprep.subr.mxu0 0.0
          %906 = vmatpush1.msra.mxu0 0.0
          %907 = vmatprep.subr.mxu0 0.0
          %908 = vmatpush1.msra.mxu0 0.0
          %909 = vmatprep.subr.mxu0 0.0
          %910 = vmatpush1.msra.mxu0 0.0
          %911 = vmatprep.subr.mxu0 0.0
          %912 = vmatpush1.msra.mxu0 0.0
          %913 = vmatprep.subr.mxu0 0.0
          %914 = vmatpush1.msra.mxu0 0.0
          %915 = vmatprep.subr.mxu0 0.0
          %916 = vmatpush1.msra.mxu0 0.0
          %917 = vmatprep.subr.mxu0 0.0
          %918 = vmatpush1.msra.mxu0 0.0
          %919 = vmatprep.subr.mxu0 0.0
          %920 = vmatpush1.msra.mxu0 0.0
          %921 = vmatprep.subr.mxu0 0.0
          %922 = vmatpush1.msra.mxu0 0.0
          %923 = vmatprep.subr.mxu0 0.0
          %924 = vmatpush1.msra.mxu0 0.0
          %925 = vmatprep.subr.mxu0 0.0
          %926 = vmatpush1.msra.mxu0 0.0
          %927 = vmatprep.subr.mxu0 0.0
          %928 = vmatpush1.msra.mxu0 0.0
          %929 = vmatprep.subr.mxu0 0.0
          %930 = vmatpush1.msra.mxu0 0.0
          %931 = vmatprep.subr.mxu0 0.0
          %932 = vmatpush1.msra.mxu0 0.0
          %933 = vmatprep.mubr.f32.mxu0 0.0
          %934 = vmatmul.mubr.f32.gmra.mrb[0].mxu0 %v360
          %v935 = vpop.f32.mrb[0].mxu0
          %v936 = vadd.f32 %v867, %v935
          %v937 = vpop.f32.mrb[0].mxu0
          %938 = vdwg.mxu0
          %s939 = scalar_lea.vmem [#allocation2], 24
          %940 = vst.msk [vmem:[%s939] sm:$0xff] %vm432, %v936
          %s941 = scalar_lea.vmem %s5, 96
          %v942 = vld [vmem:[%s941] sm:$0xff]
          %v943 = vld [vmem:[%s941 + $0x8] sm:$0xff]
          %v944 = vld [vmem:[%s941 + $0x10] sm:$0xff]
          %v945 = vld [vmem:[%s941 + $0x18] sm:$0xff]
          %s946 = scalar_lea.vmem %s6, 3
          %v947 = vld [vmem:[%s946] sm:$0x1]
          %v949 = vlaneseq
          %v950 = vshrl.u32 %v949, 7
          %v951 = vsub.s32 0, %v950
          %v952 = vrot.slane %v947, %v951
          %954 = vmatprep.subr.mxu0 0.0
          %955 = vmatpush1.msra.mxu0 %v942
          %956 = vmatprep.subr.mxu0 0.0
          %957 = vmatpush1.msra.mxu0 %v943
          %958 = vmatprep.subr.mxu0 0.0
          %959 = vmatpush1.msra.mxu0 %v944
          %960 = vmatprep.subr.mxu0 0.0
          %961 = vmatpush1.msra.mxu0 %v945
          %962 = vmatprep.subr.mxu0 0.0
          %963 = vmatpush1.msra.mxu0 0.0
          %964 = vmatprep.subr.mxu0 0.0
          %965 = vmatpush1.msra.mxu0 0.0
          %966 = vmatprep.subr.mxu0 0.0
          %967 = vmatpush1.msra.mxu0 0.0
          %968 = vmatprep.subr.mxu0 0.0
          %969 = vmatpush1.msra.mxu0 0.0
          %970 = vmatprep.subr.mxu0 0.0
          %971 = vmatpush1.msra.mxu0 0.0
          %972 = vmatprep.subr.mxu0 0.0
          %973 = vmatpush1.msra.mxu0 0.0
          %974 = vmatprep.subr.mxu0 0.0
          %975 = vmatpush1.msra.mxu0 0.0
          %976 = vmatprep.subr.mxu0 0.0
          %977 = vmatpush1.msra.mxu0 0.0
          %978 = vmatprep.subr.mxu0 0.0
          %979 = vmatpush1.msra.mxu0 0.0
          %980 = vmatprep.subr.mxu0 0.0
          %981 = vmatpush1.msra.mxu0 0.0
          %982 = vmatprep.subr.mxu0 0.0
          %983 = vmatpush1.msra.mxu0 0.0
          %984 = vmatprep.subr.mxu0 0.0
          %985 = vmatpush1.msra.mxu0 0.0
          %986 = vmatprep.subr.mxu0 0.0
          %987 = vmatpush1.msra.mxu0 0.0
          %988 = vmatprep.subr.mxu0 0.0
          %989 = vmatpush1.msra.mxu0 0.0
          %990 = vmatprep.subr.mxu0 0.0
          %991 = vmatpush1.msra.mxu0 0.0
          %992 = vmatprep.subr.mxu0 0.0
          %993 = vmatpush1.msra.mxu0 0.0
          %994 = vmatprep.subr.mxu0 0.0
          %995 = vmatpush1.msra.mxu0 0.0
          %996 = vmatprep.subr.mxu0 0.0
          %997 = vmatpush1.msra.mxu0 0.0
          %998 = vmatprep.subr.mxu0 0.0
          %999 = vmatpush1.msra.mxu0 0.0
          %1000 = vmatprep.subr.mxu0 0.0
          %1001 = vmatpush1.msra.mxu0 0.0
          %1002 = vmatprep.subr.mxu0 0.0
          %1003 = vmatpush1.msra.mxu0 0.0
          %1004 = vmatprep.subr.mxu0 0.0
          %1005 = vmatpush1.msra.mxu0 0.0
          %1006 = vmatprep.subr.mxu0 0.0
          %1007 = vmatpush1.msra.mxu0 0.0
          %1008 = vmatprep.subr.mxu0 0.0
          %1009 = vmatpush1.msra.mxu0 0.0
          %1010 = vmatprep.subr.mxu0 0.0
          %1011 = vmatpush1.msra.mxu0 0.0
          %1012 = vmatprep.subr.mxu0 0.0
          %1013 = vmatpush1.msra.mxu0 0.0
          %1014 = vmatprep.subr.mxu0 0.0
          %1015 = vmatpush1.msra.mxu0 0.0
          %1016 = vmatprep.subr.mxu0 0.0
          %1017 = vmatpush1.msra.mxu0 0.0
          %1018 = vmatprep.mubr.f32.mxu0 0.0
          %1019 = vmatmul.mubr.f32.gmra.mrb[0].mxu0 %v360
          %v1020 = vpop.f32.mrb[0].mxu0
          %v1021 = vadd.f32 %v952, %v1020
          %v1022 = vpop.f32.mrb[0].mxu0
          %1023 = vdwg.mxu0
          %s1024 = scalar_lea.vmem [#allocation3], 24
          %1025 = vst.msk [vmem:[%s1024] sm:$0xff] %vm432, %v1021
        $region60: #{tpu_custom_call.1} parent=55 // pred_fallthru
          _
        %s1026 = smul.u32 %s28, 8
        %s1027 = scalar_lea.vmem %s341, %s1026
        %v1028 = vld [vmem:[%s1027] sm:$0xff]
        %v1029 = vld [vmem:[%s1] sm:$0xff]
        %v1030 = vld [vmem:[%s1 + $0x8] sm:$0xff]
        %v1031 = vld [vmem:[%s1 + $0x10] sm:$0xff]
        %v1032 = vld [vmem:[%s1 + $0x18] sm:$0xff]
        %v1033 = vld [vmem:[%s2] sm:$0x1]
        %v1035 = vlaneseq
        %v1036 = vshrl.u32 %v1035, 7
        %v1037 = vsub.s32 0, %v1036
        %v1038 = vrot.slane %v1033, %v1037
        %vm1040 = vcmask 261120
        %v1042 = vsel %vm1040, %v1028, 0
        %1044 = vmatprep.subr.mxu0 0.0
        %1045 = vmatpush1.msra.mxu0 %v1029
        %1046 = vmatprep.subr.mxu0 0.0
        %1047 = vmatpush1.msra.mxu0 %v1030
        %1048 = vmatprep.subr.mxu0 0.0
        %1049 = vmatpush1.msra.mxu0 %v1031
        %1050 = vmatprep.subr.mxu0 0.0
        %1051 = vmatpush1.msra.mxu0 %v1032
        %1052 = vmatprep.subr.mxu0 0.0
        %1053 = vmatpush1.msra.mxu0 0.0
        %1054 = vmatprep.subr.mxu0 0.0
        %1055 = vmatpush1.msra.mxu0 0.0
        %1056 = vmatprep.subr.mxu0 0.0
        %1057 = vmatpush1.msra.mxu0 0.0
        %1058 = vmatprep.subr.mxu0 0.0
        %1059 = vmatpush1.msra.mxu0 0.0
        %1060 = vmatprep.subr.mxu0 0.0
        %1061 = vmatpush1.msra.mxu0 0.0
        %1062 = vmatprep.subr.mxu0 0.0
        %1063 = vmatpush1.msra.mxu0 0.0
        %1064 = vmatprep.subr.mxu0 0.0
        %1065 = vmatpush1.msra.mxu0 0.0
        %1066 = vmatprep.subr.mxu0 0.0
        %1067 = vmatpush1.msra.mxu0 0.0
        %1068 = vmatprep.subr.mxu0 0.0
        %1069 = vmatpush1.msra.mxu0 0.0
        %1070 = vmatprep.subr.mxu0 0.0
        %1071 = vmatpush1.msra.mxu0 0.0
        %1072 = vmatprep.subr.mxu0 0.0
        %1073 = vmatpush1.msra.mxu0 0.0
        %1074 = vmatprep.subr.mxu0 0.0
        %1075 = vmatpush1.msra.mxu0 0.0
        %1076 = vmatprep.subr.mxu0 0.0
        %1077 = vmatpush1.msra.mxu0 0.0
        %1078 = vmatprep.subr.mxu0 0.0
        %1079 = vmatpush1.msra.mxu0 0.0
        %1080 = vmatprep.subr.mxu0 0.0
        %1081 = vmatpush1.msra.mxu0 0.0
        %1082 = vmatprep.subr.mxu0 0.0
        %1083 = vmatpush1.msra.mxu0 0.0
        %1084 = vmatprep.subr.mxu0 0.0
        %1085 = vmatpush1.msra.mxu0 0.0
        %1086 = vmatprep.subr.mxu0 0.0
        %1087 = vmatpush1.msra.mxu0 0.0
        %1088 = vmatprep.subr.mxu0 0.0
        %1089 = vmatpush1.msra.mxu0 0.0
        %1090 = vmatprep.subr.mxu0 0.0
        %1091 = vmatpush1.msra.mxu0 0.0
        %1092 = vmatprep.subr.mxu0 0.0
        %1093 = vmatpush1.msra.mxu0 0.0
        %1094 = vmatprep.subr.mxu0 0.0
        %1095 = vmatpush1.msra.mxu0 0.0
        %1096 = vmatprep.subr.mxu0 0.0
        %1097 = vmatpush1.msra.mxu0 0.0
        %1098 = vmatprep.subr.mxu0 0.0
        %1099 = vmatpush1.msra.mxu0 0.0
        %1100 = vmatprep.subr.mxu0 0.0
        %1101 = vmatpush1.msra.mxu0 0.0
        %1102 = vmatprep.subr.mxu0 0.0
        %1103 = vmatpush1.msra.mxu0 0.0
        %1104 = vmatprep.subr.mxu0 0.0
        %1105 = vmatpush1.msra.mxu0 0.0
        %1106 = vmatprep.subr.mxu0 0.0
        %1107 = vmatpush1.msra.mxu0 0.0
        %1108 = vmatprep.mubr.f32.mxu0 0.0
        %1109 = vmatmul.mubr.f32.gmra.mrb[0].mxu0 %v1042
        %v1110 = vpop.f32.mrb[0].mxu0
        %v1111 = vadd.f32 %v1038, %v1110
        %v1112 = vpop.f32.mrb[0].mxu0
        %1113 = vdwg.mxu0
        %v1114 = vmul.f32 %v1111, 0.17677669
        %v1115 = vld [vmem:[#allocation2] sm:$0xff]
        %vm1116 = vcmask 64512
        %v1118 = vsel %vm1116, %v1114, 0
        %v1121 = vsel %vm1116, %v1115, 0
        %1123 = vmatprep.subr.mxu0 0.0
        %1124 = vmatpush1.xpose.msra.mxu0 %v1121
        %1125 = vmatprep.subr.mxu0 0.0
        %1126 = vmatpush1.xpose.msra.mxu0 0.0
        %1127 = vmatprep.subr.mxu0 0.0
        %1128 = vmatpush1.xpose.msra.mxu0 0.0
        %1129 = vmatprep.subr.mxu0 0.0
        %1130 = vmatpush1.xpose.msra.mxu0 0.0
        %1131 = vmatprep.subr.mxu0 0.0
        %1132 = vmatpush1.xpose.msra.mxu0 0.0
        %1133 = vmatprep.subr.mxu0 0.0
        %1134 = vmatpush1.xpose.msra.mxu0 0.0
        %1135 = vmatprep.subr.mxu0 0.0
        %1136 = vmatpush1.xpose.msra.mxu0 0.0
        %1137 = vmatprep.subr.mxu0 0.0
        %1138 = vmatpush1.xpose.msra.mxu0 0.0
        %1139 = vmatprep.subr.mxu0 0.0
        %1140 = vmatpush1.xpose.msra.mxu0 0.0
        %1141 = vmatprep.subr.mxu0 0.0
        %1142 = vmatpush1.xpose.msra.mxu0 0.0
        %1143 = vmatprep.subr.mxu0 0.0
        %1144 = vmatpush1.xpose.msra.mxu0 0.0
        %1145 = vmatprep.subr.mxu0 0.0
        %1146 = vmatpush1.xpose.msra.mxu0 0.0
        %1147 = vmatprep.subr.mxu0 0.0
        %1148 = vmatpush1.xpose.msra.mxu0 0.0
        %1149 = vmatprep.subr.mxu0 0.0
        %1150 = vmatpush1.xpose.msra.mxu0 0.0
        %1151 = vmatprep.subr.mxu0 0.0
        %1152 = vmatpush1.xpose.msra.mxu0 0.0
        %1153 = vmatprep.subr.mxu0 0.0
        %1154 = vmatpush1.xpose.msra.mxu0 0.0
        %1155 = vmatprep.subr.mxu0 0.0
        %1156 = vmatpush1.xpose.msra.mxu0 0.0
        %1157 = vmatprep.subr.mxu0 0.0
        %1158 = vmatpush1.xpose.msra.mxu0 0.0
        %1159 = vmatprep.subr.mxu0 0.0
        %1160 = vmatpush1.xpose.msra.mxu0 0.0
        %1161 = vmatprep.subr.mxu0 0.0
        %1162 = vmatpush1.xpose.msra.mxu0 0.0
        %1163 = vmatprep.subr.mxu0 0.0
        %1164 = vmatpush1.xpose.msra.mxu0 0.0
        %1165 = vmatprep.subr.mxu0 0.0
        %1166 = vmatpush1.xpose.msra.mxu0 0.0
        %1167 = vmatprep.subr.mxu0 0.0
        %1168 = vmatpush1.xpose.msra.mxu0 0.0
        %1169 = vmatprep.subr.mxu0 0.0
        %1170 = vmatpush1.xpose.msra.mxu0 0.0
        %1171 = vmatprep.subr.mxu0 0.0
        %1172 = vmatpush1.xpose.msra.mxu0 0.0
        %1173 = vmatprep.subr.mxu0 0.0
        %1174 = vmatpush1.xpose.msra.mxu0 0.0
        %1175 = vmatprep.subr.mxu0 0.0
        %1176 = vmatpush1.xpose.msra.mxu0 0.0
        %1177 = vmatprep.subr.mxu0 0.0
        %1178 = vmatpush1.xpose.msra.mxu0 0.0
        %1179 = vmatprep.subr.mxu0 0.0
        %1180 = vmatpush1.xpose.msra.mxu0 0.0
        %1181 = vmatprep.subr.mxu0 0.0
        %1182 = vmatpush1.xpose.msra.mxu0 0.0
        %1183 = vmatprep.subr.mxu0 0.0
        %1184 = vmatpush1.xpose.msra.mxu0 0.0
        %1185 = vmatprep.subr.mxu0 0.0
        %1186 = vmatpush1.xpose.msra.mxu0 0.0
        %1187 = vmatprep.mubr.f32.mxu0 0.0
        %1188 = vmatmul.mubr.f32.gmra.mrb[0].mxu0 %v1118
        %v1189 = vpop.f32.mrb[0].mxu0
        %v1190 = vadd.f32 0.0, %v1189
        %v1191 = vpop.f32.mrb[0].mxu0
        %1192 = vdwg.mxu0
        %v1193 = vsel %vm1116, %v1190, -inf
        %1194 = vmax.xlane.f32.xlu0 %v1193
        %v1195 = vpop.xlane.xlu0 %1194
        %v1196 = vsub.f32 %v1190, %v1195
        %v1197 = vmul.f32 %v1196, 1.442695
        %v1198 = vpow.pop %v1197
        %v1199 = vsel %vm1116, %v1198, 0.0
        %1200 = vadd.xlane.f32.xlu0 %v1199
        %v1201 = vpop.xlane.xlu0 %1200
        %v1202 = vld [vmem:[#allocation3] sm:$0xff]
        %v1204 = vsel %vm1116, %v1198, 0
        %1206 = vmatprep.subr.mxu0 0.0
        %1207 = vmatpush1.msra.mxu0 %v1202
        %1208 = vmatprep.subr.mxu0 0.0
        %1209 = vmatpush1.msra.mxu0 0.0
        %1210 = vmatprep.subr.mxu0 0.0
        %1211 = vmatpush1.msra.mxu0 0.0
        %1212 = vmatprep.subr.mxu0 0.0
        %1213 = vmatpush1.msra.mxu0 0.0
        %1214 = vmatprep.subr.mxu0 0.0
        %1215 = vmatpush1.msra.mxu0 0.0
        %1216 = vmatprep.subr.mxu0 0.0
        %1217 = vmatpush1.msra.mxu0 0.0
        %1218 = vmatprep.subr.mxu0 0.0
        %1219 = vmatpush1.msra.mxu0 0.0
        %1220 = vmatprep.subr.mxu0 0.0
        %1221 = vmatpush1.msra.mxu0 0.0
        %1222 = vmatprep.subr.mxu0 0.0
        %1223 = vmatpush1.msra.mxu0 0.0
        %1224 = vmatprep.subr.mxu0 0.0
        %1225 = vmatpush1.msra.mxu0 0.0
        %1226 = vmatprep.subr.mxu0 0.0
        %1227 = vmatpush1.msra.mxu0 0.0
        %1228 = vmatprep.subr.mxu0 0.0
        %1229 = vmatpush1.msra.mxu0 0.0
        %1230 = vmatprep.subr.mxu0 0.0
        %1231 = vmatpush1.msra.mxu0 0.0
        %1232 = vmatprep.subr.mxu0 0.0
        %1233 = vmatpush1.msra.mxu0 0.0
        %1234 = vmatprep.subr.mxu0 0.0
        %1235 = vmatpush1.msra.mxu0 0.0
        %1236 = vmatprep.subr.mxu0 0.0
        %1237 = vmatpush1.msra.mxu0 0.0
        %1238 = vmatprep.subr.mxu0 0.0
        %1239 = vmatpush1.msra.mxu0 0.0
        %1240 = vmatprep.subr.mxu0 0.0
        %1241 = vmatpush1.msra.mxu0 0.0
        %1242 = vmatprep.subr.mxu0 0.0
        %1243 = vmatpush1.msra.mxu0 0.0
        %1244 = vmatprep.subr.mxu0 0.0
        %1245 = vmatpush1.msra.mxu0 0.0
        %1246 = vmatprep.subr.mxu0 0.0
        %1247 = vmatpush1.msra.mxu0 0.0
        %1248 = vmatprep.subr.mxu0 0.0
        %1249 = vmatpush1.msra.mxu0 0.0
        %1250 = vmatprep.subr.mxu0 0.0
        %1251 = vmatpush1.msra.mxu0 0.0
        %1252 = vmatprep.subr.mxu0 0.0
        %1253 = vmatpush1.msra.mxu0 0.0
        %1254 = vmatprep.subr.mxu0 0.0
        %1255 = vmatpush1.msra.mxu0 0.0
        %1256 = vmatprep.subr.mxu0 0.0
        %1257 = vmatpush1.msra.mxu0 0.0
        %1258 = vmatprep.subr.mxu0 0.0
        %1259 = vmatpush1.msra.mxu0 0.0
        %1260 = vmatprep.subr.mxu0 0.0
        %1261 = vmatpush1.msra.mxu0 0.0
        %1262 = vmatprep.subr.mxu0 0.0
        %1263 = vmatpush1.msra.mxu0 0.0
        %1264 = vmatprep.subr.mxu0 0.0
        %1265 = vmatpush1.msra.mxu0 0.0
        %1266 = vmatprep.subr.mxu0 0.0
        %1267 = vmatpush1.msra.mxu0 0.0
        %1268 = vmatprep.subr.mxu0 0.0
        %1269 = vmatpush1.msra.mxu0 0.0
        %1270 = vmatprep.mubr.f32.mxu0 0.0
        %1271 = vmatmul.mubr.f32.gmra.mrb[0].mxu0 %v1204
        %v1272 = vpop.f32.mrb[0].mxu0
        %v1273 = vadd.f32 0.0, %v1272
        %v1274 = vpop.f32.mrb[0].mxu0
        %1275 = vdwg.mxu0
        %v1276 = vrcp.pop %v1201
        %v1277 = vmul.f32 %v1273, %v1276
        %1278 = vst.msk [vmem:[#allocation4] sm:$0xff] %vm1116, %v1277
        %s1279 = scalar_lea.vmem %s1, 32
        %v1280 = vld [vmem:[%s1279] sm:$0xff]
        %v1281 = vld [vmem:[%s1279 + $0x8] sm:$0xff]
        %v1282 = vld [vmem:[%s1279 + $0x10] sm:$0xff]
        %v1283 = vld [vmem:[%s1279 + $0x18] sm:$0xff]
        %s1284 = scalar_lea.vmem %s2, 1
        %v1285 = vld [vmem:[%s1284] sm:$0x1]
        %v1287 = vlaneseq
        %v1288 = vshrl.u32 %v1287, 7
        %v1289 = vsub.s32 0, %v1288
        %v1290 = vrot.slane %v1285, %v1289
        %1292 = vmatprep.subr.mxu0 0.0
        %1293 = vmatpush1.msra.mxu0 %v1280
        %1294 = vmatprep.subr.mxu0 0.0
        %1295 = vmatpush1.msra.mxu0 %v1281
        %1296 = vmatprep.subr.mxu0 0.0
        %1297 = vmatpush1.msra.mxu0 %v1282
        %1298 = vmatprep.subr.mxu0 0.0
        %1299 = vmatpush1.msra.mxu0 %v1283
        %1300 = vmatprep.subr.mxu0 0.0
        %1301 = vmatpush1.msra.mxu0 0.0
        %1302 = vmatprep.subr.mxu0 0.0
        %1303 = vmatpush1.msra.mxu0 0.0
        %1304 = vmatprep.subr.mxu0 0.0
        %1305 = vmatpush1.msra.mxu0 0.0
        %1306 = vmatprep.subr.mxu0 0.0
        %1307 = vmatpush1.msra.mxu0 0.0
        %1308 = vmatprep.subr.mxu0 0.0
        %1309 = vmatpush1.msra.mxu0 0.0
        %1310 = vmatprep.subr.mxu0 0.0
        %1311 = vmatpush1.msra.mxu0 0.0
        %1312 = vmatprep.subr.mxu0 0.0
        %1313 = vmatpush1.msra.mxu0 0.0
        %1314 = vmatprep.subr.mxu0 0.0
        %1315 = vmatpush1.msra.mxu0 0.0
        %1316 = vmatprep.subr.mxu0 0.0
        %1317 = vmatpush1.msra.mxu0 0.0
        %1318 = vmatprep.subr.mxu0 0.0
        %1319 = vmatpush1.msra.mxu0 0.0
        %1320 = vmatprep.subr.mxu0 0.0
        %1321 = vmatpush1.msra.mxu0 0.0
        %1322 = vmatprep.subr.mxu0 0.0
        %1323 = vmatpush1.msra.mxu0 0.0
        %1324 = vmatprep.subr.mxu0 0.0
        %1325 = vmatpush1.msra.mxu0 0.0
        %1326 = vmatprep.subr.mxu0 0.0
        %1327 = vmatpush1.msra.mxu0 0.0
        %1328 = vmatprep.subr.mxu0 0.0
        %1329 = vmatpush1.msra.mxu0 0.0
        %1330 = vmatprep.subr.mxu0 0.0
        %1331 = vmatpush1.msra.mxu0 0.0
        %1332 = vmatprep.subr.mxu0 0.0
        %1333 = vmatpush1.msra.mxu0 0.0
        %1334 = vmatprep.subr.mxu0 0.0
        %1335 = vmatpush1.msra.mxu0 0.0
        %1336 = vmatprep.subr.mxu0 0.0
        %1337 = vmatpush1.msra.mxu0 0.0
        %1338 = vmatprep.subr.mxu0 0.0
        %1339 = vmatpush1.msra.mxu0 0.0
        %1340 = vmatprep.subr.mxu0 0.0
        %1341 = vmatpush1.msra.mxu0 0.0
        %1342 = vmatprep.subr.mxu0 0.0
        %1343 = vmatpush1.msra.mxu0 0.0
        %1344 = vmatprep.subr.mxu0 0.0
        %1345 = vmatpush1.msra.mxu0 0.0
        %1346 = vmatprep.subr.mxu0 0.0
        %1347 = vmatpush1.msra.mxu0 0.0
        %1348 = vmatprep.subr.mxu0 0.0
        %1349 = vmatpush1.msra.mxu0 0.0
        %1350 = vmatprep.subr.mxu0 0.0
        %1351 = vmatpush1.msra.mxu0 0.0
        %1352 = vmatprep.subr.mxu0 0.0
        %1353 = vmatpush1.msra.mxu0 0.0
        %1354 = vmatprep.subr.mxu0 0.0
        %1355 = vmatpush1.msra.mxu0 0.0
        %1356 = vmatprep.mubr.f32.mxu0 0.0
        %1357 = vmatmul.mubr.f32.gmra.mrb[0].mxu0 %v1042
        %v1358 = vpop.f32.mrb[0].mxu0
        %v1359 = vadd.f32 %v1290, %v1358
        %v1360 = vpop.f32.mrb[0].mxu0
        %1361 = vdwg.mxu0
        %v1362 = vmul.f32 %v1359, 0.17677669
        %s1363 = scalar_lea.vmem [#allocation2], 8
        %v1364 = vld [vmem:[%s1363] sm:$0xff]
        %v1366 = vsel %vm1116, %v1362, 0
        %v1369 = vsel %vm1116, %v1364, 0
        %1371 = vmatprep.subr.mxu0 0.0
        %1372 = vmatpush1.xpose.msra.mxu0 %v1369
        %1373 = vmatprep.subr.mxu0 0.0
        %1374 = vmatpush1.xpose.msra.mxu0 0.0
        %1375 = vmatprep.subr.mxu0 0.0
        %1376 = vmatpush1.xpose.msra.mxu0 0.0
        %1377 = vmatprep.subr.mxu0 0.0
        %1378 = vmatpush1.xpose.msra.mxu0 0.0
        %1379 = vmatprep.subr.mxu0 0.0
        %1380 = vmatpush1.xpose.msra.mxu0 0.0
        %1381 = vmatprep.subr.mxu0 0.0
        %1382 = vmatpush1.xpose.msra.mxu0 0.0
        %1383 = vmatprep.subr.mxu0 0.0
        %1384 = vmatpush1.xpose.msra.mxu0 0.0
        %1385 = vmatprep.subr.mxu0 0.0
        %1386 = vmatpush1.xpose.msra.mxu0 0.0
        %1387 = vmatprep.subr.mxu0 0.0
        %1388 = vmatpush1.xpose.msra.mxu0 0.0
        %1389 = vmatprep.subr.mxu0 0.0
        %1390 = vmatpush1.xpose.msra.mxu0 0.0
        %1391 = vmatprep.subr.mxu0 0.0
        %1392 = vmatpush1.xpose.msra.mxu0 0.0
        %1393 = vmatprep.subr.mxu0 0.0
        %1394 = vmatpush1.xpose.msra.mxu0 0.0
        %1395 = vmatprep.subr.mxu0 0.0
        %1396 = vmatpush1.xpose.msra.mxu0 0.0
        %1397 = vmatprep.subr.mxu0 0.0
        %1398 = vmatpush1.xpose.msra.mxu0 0.0
        %1399 = vmatprep.subr.mxu0 0.0
        %1400 = vmatpush1.xpose.msra.mxu0 0.0
        %1401 = vmatprep.subr.mxu0 0.0
        %1402 = vmatpush1.xpose.msra.mxu0 0.0
        %1403 = vmatprep.subr.mxu0 0.0
        %1404 = vmatpush1.xpose.msra.mxu0 0.0
        %1405 = vmatprep.subr.mxu0 0.0
        %1406 = vmatpush1.xpose.msra.mxu0 0.0
        %1407 = vmatprep.subr.mxu0 0.0
        %1408 = vmatpush1.xpose.msra.mxu0 0.0
        %1409 = vmatprep.subr.mxu0 0.0
        %1410 = vmatpush1.xpose.msra.mxu0 0.0
        %1411 = vmatprep.subr.mxu0 0.0
        %1412 = vmatpush1.xpose.msra.mxu0 0.0
        %1413 = vmatprep.subr.mxu0 0.0
        %1414 = vmatpush1.xpose.msra.mxu0 0.0
        %1415 = vmatprep.subr.mxu0 0.0
        %1416 = vmatpush1.xpose.msra.mxu0 0.0
        %1417 = vmatprep.subr.mxu0 0.0
        %1418 = vmatpush1.xpose.msra.mxu0 0.0
        %1419 = vmatprep.subr.mxu0 0.0
        %1420 = vmatpush1.xpose.msra.mxu0 0.0
        %1421 = vmatprep.subr.mxu0 0.0
        %1422 = vmatpush1.xpose.msra.mxu0 0.0
        %1423 = vmatprep.subr.mxu0 0.0
        %1424 = vmatpush1.xpose.msra.mxu0 0.0
        %1425 = vmatprep.subr.mxu0 0.0
        %1426 = vmatpush1.xpose.msra.mxu0 0.0
        %1427 = vmatprep.subr.mxu0 0.0
        %1428 = vmatpush1.xpose.msra.mxu0 0.0
        %1429 = vmatprep.subr.mxu0 0.0
        %1430 = vmatpush1.xpose.msra.mxu0 0.0
        %1431 = vmatprep.subr.mxu0 0.0
        %1432 = vmatpush1.xpose.msra.mxu0 0.0
        %1433 = vmatprep.subr.mxu0 0.0
        %1434 = vmatpush1.xpose.msra.mxu0 0.0
        %1435 = vmatprep.mubr.f32.mxu0 0.0
        %1436 = vmatmul.mubr.f32.gmra.mrb[0].mxu0 %v1366
        %v1437 = vpop.f32.mrb[0].mxu0
        %v1438 = vadd.f32 0.0, %v1437
        %v1439 = vpop.f32.mrb[0].mxu0
        %1440 = vdwg.mxu0
        %v1441 = vsel %vm1116, %v1438, -inf
        %1442 = vmax.xlane.f32.xlu0 %v1441
        %v1443 = vpop.xlane.xlu0 %1442
        %v1444 = vsub.f32 %v1438, %v1443
        %v1445 = vmul.f32 %v1444, 1.442695
        %v1446 = vpow.pop %v1445
        %v1447 = vsel %vm1116, %v1446, 0.0
        %1448 = vadd.xlane.f32.xlu0 %v1447
        %v1449 = vpop.xlane.xlu0 %1448
        %s1450 = scalar_lea.vmem [#allocation3], 8
        %v1451 = vld [vmem:[%s1450] sm:$0xff]
        %v1453 = vsel %vm1116, %v1446, 0
        %1455 = vmatprep.subr.mxu0 0.0
        %1456 = vmatpush1.msra.mxu0 %v1451
        %1457 = vmatprep.subr.mxu0 0.0
        %1458 = vmatpush1.msra.mxu0 0.0
        %1459 = vmatprep.subr.mxu0 0.0
        %1460 = vmatpush1.msra.mxu0 0.0
        %1461 = vmatprep.subr.mxu0 0.0
        %1462 = vmatpush1.msra.mxu0 0.0
        %1463 = vmatprep.subr.mxu0 0.0
        %1464 = vmatpush1.msra.mxu0 0.0
        %1465 = vmatprep.subr.mxu0 0.0
        %1466 = vmatpush1.msra.mxu0 0.0
        %1467 = vmatprep.subr.mxu0 0.0
        %1468 = vmatpush1.msra.mxu0 0.0
        %1469 = vmatprep.subr.mxu0 0.0
        %1470 = vmatpush1.msra.mxu0 0.0
        %1471 = vmatprep.subr.mxu0 0.0
        %1472 = vmatpush1.msra.mxu0 0.0
        %1473 = vmatprep.subr.mxu0 0.0
        %1474 = vmatpush1.msra.mxu0 0.0
        %1475 = vmatprep.subr.mxu0 0.0
        %1476 = vmatpush1.msra.mxu0 0.0
        %1477 = vmatprep.subr.mxu0 0.0
        %1478 = vmatpush1.msra.mxu0 0.0
        %1479 = vmatprep.subr.mxu0 0.0
        %1480 = vmatpush1.msra.mxu0 0.0
        %1481 = vmatprep.subr.mxu0 0.0
        %1482 = vmatpush1.msra.mxu0 0.0
        %1483 = vmatprep.subr.mxu0 0.0
        %1484 = vmatpush1.msra.mxu0 0.0
        %1485 = vmatprep.subr.mxu0 0.0
        %1486 = vmatpush1.msra.mxu0 0.0
        %1487 = vmatprep.subr.mxu0 0.0
        %1488 = vmatpush1.msra.mxu0 0.0
        %1489 = vmatprep.subr.mxu0 0.0
        %1490 = vmatpush1.msra.mxu0 0.0
        %1491 = vmatprep.subr.mxu0 0.0
        %1492 = vmatpush1.msra.mxu0 0.0
        %1493 = vmatprep.subr.mxu0 0.0
        %1494 = vmatpush1.msra.mxu0 0.0
        %1495 = vmatprep.subr.mxu0 0.0
        %1496 = vmatpush1.msra.mxu0 0.0
        %1497 = vmatprep.subr.mxu0 0.0
        %1498 = vmatpush1.msra.mxu0 0.0
        %1499 = vmatprep.subr.mxu0 0.0
        %1500 = vmatpush1.msra.mxu0 0.0
        %1501 = vmatprep.subr.mxu0 0.0
        %1502 = vmatpush1.msra.mxu0 0.0
        %1503 = vmatprep.subr.mxu0 0.0
        %1504 = vmatpush1.msra.mxu0 0.0
        %1505 = vmatprep.subr.mxu0 0.0
        %1506 = vmatpush1.msra.mxu0 0.0
        %1507 = vmatprep.subr.mxu0 0.0
        %1508 = vmatpush1.msra.mxu0 0.0
        %1509 = vmatprep.subr.mxu0 0.0
        %1510 = vmatpush1.msra.mxu0 0.0
        %1511 = vmatprep.subr.mxu0 0.0
        %1512 = vmatpush1.msra.mxu0 0.0
        %1513 = vmatprep.subr.mxu0 0.0
        %1514 = vmatpush1.msra.mxu0 0.0
        %1515 = vmatprep.subr.mxu0 0.0
        %1516 = vmatpush1.msra.mxu0 0.0
        %1517 = vmatprep.subr.mxu0 0.0
        %1518 = vmatpush1.msra.mxu0 0.0
        %1519 = vmatprep.mubr.f32.mxu0 0.0
        %1520 = vmatmul.mubr.f32.gmra.mrb[0].mxu0 %v1453
        %v1521 = vpop.f32.mrb[0].mxu0
        %v1522 = vadd.f32 0.0, %v1521
        %v1523 = vpop.f32.mrb[0].mxu0
        %1524 = vdwg.mxu0
        %v1525 = vrcp.pop %v1449
        %v1526 = vmul.f32 %v1522, %v1525
        %1528 = vrot.lane.b32.xlu0 %v1526, 8
        %v1529 = vpop.permute.xlu0 %1528
        %vm1531 = vcmask 130112
        %1532 = vst.msk [vmem:[#allocation4] sm:$0xff] %vm1531, %v1529
        %s1533 = scalar_lea.vmem %s1, 64
        %v1534 = vld [vmem:[%s1533] sm:$0xff]
        %v1535 = vld [vmem:[%s1533 + $0x8] sm:$0xff]
        %v1536 = vld [vmem:[%s1533 + $0x10] sm:$0xff]
        %v1537 = vld [vmem:[%s1533 + $0x18] sm:$0xff]
        %s1538 = scalar_lea.vmem %s2, 2
        %v1539 = vld [vmem:[%s1538] sm:$0x1]
        %v1541 = vlaneseq
        %v1542 = vshrl.u32 %v1541, 7
        %v1543 = vsub.s32 0, %v1542
        %v1544 = vrot.slane %v1539, %v1543
        %1546 = vmatprep.subr.mxu0 0.0
        %1547 = vmatpush1.msra.mxu0 %v1534
        %1548 = vmatprep.subr.mxu0 0.0
        %1549 = vmatpush1.msra.mxu0 %v1535
        %1550 = vmatprep.subr.mxu0 0.0
        %1551 = vmatpush1.msra.mxu0 %v1536
        %1552 = vmatprep.subr.mxu0 0.0
        %1553 = vmatpush1.msra.mxu0 %v1537
        %1554 = vmatprep.subr.mxu0 0.0
        %1555 = vmatpush1.msra.mxu0 0.0
        %1556 = vmatprep.subr.mxu0 0.0
        %1557 = vmatpush1.msra.mxu0 0.0
        %1558 = vmatprep.subr.mxu0 0.0
        %1559 = vmatpush1.msra.mxu0 0.0
        %1560 = vmatprep.subr.mxu0 0.0
        %1561 = vmatpush1.msra.mxu0 0.0
        %1562 = vmatprep.subr.mxu0 0.0
        %1563 = vmatpush1.msra.mxu0 0.0
        %1564 = vmatprep.subr.mxu0 0.0
        %1565 = vmatpush1.msra.mxu0 0.0
        %1566 = vmatprep.subr.mxu0 0.0
        %1567 = vmatpush1.msra.mxu0 0.0
        %1568 = vmatprep.subr.mxu0 0.0
        %1569 = vmatpush1.msra.mxu0 0.0
        %1570 = vmatprep.subr.mxu0 0.0
        %1571 = vmatpush1.msra.mxu0 0.0
        %1572 = vmatprep.subr.mxu0 0.0
        %1573 = vmatpush1.msra.mxu0 0.0
        %1574 = vmatprep.subr.mxu0 0.0
        %1575 = vmatpush1.msra.mxu0 0.0
        %1576 = vmatprep.subr.mxu0 0.0
        %1577 = vmatpush1.msra.mxu0 0.0
        %1578 = vmatprep.subr.mxu0 0.0
        %1579 = vmatpush1.msra.mxu0 0.0
        %1580 = vmatprep.subr.mxu0 0.0
        %1581 = vmatpush1.msra.mxu0 0.0
        %1582 = vmatprep.subr.mxu0 0.0
        %1583 = vmatpush1.msra.mxu0 0.0
        %1584 = vmatprep.subr.mxu0 0.0
        %1585 = vmatpush1.msra.mxu0 0.0
        %1586 = vmatprep.subr.mxu0 0.0
        %1587 = vmatpush1.msra.mxu0 0.0
        %1588 = vmatprep.subr.mxu0 0.0
        %1589 = vmatpush1.msra.mxu0 0.0
        %1590 = vmatprep.subr.mxu0 0.0
        %1591 = vmatpush1.msra.mxu0 0.0
        %1592 = vmatprep.subr.mxu0 0.0
        %1593 = vmatpush1.msra.mxu0 0.0
        %1594 = vmatprep.subr.mxu0 0.0
        %1595 = vmatpush1.msra.mxu0 0.0
        %1596 = vmatprep.subr.mxu0 0.0
        %1597 = vmatpush1.msra.mxu0 0.0
        %1598 = vmatprep.subr.mxu0 0.0
        %1599 = vmatpush1.msra.mxu0 0.0
        %1600 = vmatprep.subr.mxu0 0.0
        %1601 = vmatpush1.msra.mxu0 0.0
        %1602 = vmatprep.subr.mxu0 0.0
        %1603 = vmatpush1.msra.mxu0 0.0
        %1604 = vmatprep.subr.mxu0 0.0
        %1605 = vmatpush1.msra.mxu0 0.0
        %1606 = vmatprep.subr.mxu0 0.0
        %1607 = vmatpush1.msra.mxu0 0.0
        %1608 = vmatprep.subr.mxu0 0.0
        %1609 = vmatpush1.msra.mxu0 0.0
        %1610 = vmatprep.mubr.f32.mxu0 0.0
        %1611 = vmatmul.mubr.f32.gmra.mrb[0].mxu0 %v1042
        %v1612 = vpop.f32.mrb[0].mxu0
        %v1613 = vadd.f32 %v1544, %v1612
        %v1614 = vpop.f32.mrb[0].mxu0
        %1615 = vdwg.mxu0
        %v1616 = vmul.f32 %v1613, 0.17677669
        %s1617 = scalar_lea.vmem [#allocation2], 16
        %v1618 = vld [vmem:[%s1617] sm:$0xff]
        %v1620 = vsel %vm1116, %v1616, 0
        %v1623 = vsel %vm1116, %v1618, 0
        %1625 = vmatprep.subr.mxu0 0.0
        %1626 = vmatpush1.xpose.msra.mxu0 %v1623
        %1627 = vmatprep.subr.mxu0 0.0
        %1628 = vmatpush1.xpose.msra.mxu0 0.0
        %1629 = vmatprep.subr.mxu0 0.0
        %1630 = vmatpush1.xpose.msra.mxu0 0.0
        %1631 = vmatprep.subr.mxu0 0.0
        %1632 = vmatpush1.xpose.msra.mxu0 0.0
        %1633 = vmatprep.subr.mxu0 0.0
        %1634 = vmatpush1.xpose.msra.mxu0 0.0
        %1635 = vmatprep.subr.mxu0 0.0
        %1636 = vmatpush1.xpose.msra.mxu0 0.0
        %1637 = vmatprep.subr.mxu0 0.0
        %1638 = vmatpush1.xpose.msra.mxu0 0.0
        %1639 = vmatprep.subr.mxu0 0.0
        %1640 = vmatpush1.xpose.msra.mxu0 0.0
        %1641 = vmatprep.subr.mxu0 0.0
        %1642 = vmatpush1.xpose.msra.mxu0 0.0
        %1643 = vmatprep.subr.mxu0 0.0
        %1644 = vmatpush1.xpose.msra.mxu0 0.0
        %1645 = vmatprep.subr.mxu0 0.0
        %1646 = vmatpush1.xpose.msra.mxu0 0.0
        %1647 = vmatprep.subr.mxu0 0.0
        %1648 = vmatpush1.xpose.msra.mxu0 0.0
        %1649 = vmatprep.subr.mxu0 0.0
        %1650 = vmatpush1.xpose.msra.mxu0 0.0
        %1651 = vmatprep.subr.mxu0 0.0
        %1652 = vmatpush1.xpose.msra.mxu0 0.0
        %1653 = vmatprep.subr.mxu0 0.0
        %1654 = vmatpush1.xpose.msra.mxu0 0.0
        %1655 = vmatprep.subr.mxu0 0.0
        %1656 = vmatpush1.xpose.msra.mxu0 0.0
        %1657 = vmatprep.subr.mxu0 0.0
        %1658 = vmatpush1.xpose.msra.mxu0 0.0
        %1659 = vmatprep.subr.mxu0 0.0
        %1660 = vmatpush1.xpose.msra.mxu0 0.0
        %1661 = vmatprep.subr.mxu0 0.0
        %1662 = vmatpush1.xpose.msra.mxu0 0.0
        %1663 = vmatprep.subr.mxu0 0.0
        %1664 = vmatpush1.xpose.msra.mxu0 0.0
        %1665 = vmatprep.subr.mxu0 0.0
        %1666 = vmatpush1.xpose.msra.mxu0 0.0
        %1667 = vmatprep.subr.mxu0 0.0
        %1668 = vmatpush1.xpose.msra.mxu0 0.0
        %1669 = vmatprep.subr.mxu0 0.0
        %1670 = vmatpush1.xpose.msra.mxu0 0.0
        %1671 = vmatprep.subr.mxu0 0.0
        %1672 = vmatpush1.xpose.msra.mxu0 0.0
        %1673 = vmatprep.subr.mxu0 0.0
        %1674 = vmatpush1.xpose.msra.mxu0 0.0
        %1675 = vmatprep.subr.mxu0 0.0
        %1676 = vmatpush1.xpose.msra.mxu0 0.0
        %1677 = vmatprep.subr.mxu0 0.0
        %1678 = vmatpush1.xpose.msra.mxu0 0.0
        %1679 = vmatprep.subr.mxu0 0.0
        %1680 = vmatpush1.xpose.msra.mxu0 0.0
        %1681 = vmatprep.subr.mxu0 0.0
        %1682 = vmatpush1.xpose.msra.mxu0 0.0
        %1683 = vmatprep.subr.mxu0 0.0
        %1684 = vmatpush1.xpose.msra.mxu0 0.0
        %1685 = vmatprep.subr.mxu0 0.0
        %1686 = vmatpush1.xpose.msra.mxu0 0.0
        %1687 = vmatprep.subr.mxu0 0.0
        %1688 = vmatpush1.xpose.msra.mxu0 0.0
        %1689 = vmatprep.mubr.f32.mxu0 0.0
        %1690 = vmatmul.mubr.f32.gmra.mrb[0].mxu0 %v1620
        %v1691 = vpop.f32.mrb[0].mxu0
        %v1692 = vadd.f32 0.0, %v1691
        %v1693 = vpop.f32.mrb[0].mxu0
        %1694 = vdwg.mxu0
        %v1695 = vsel %vm1116, %v1692, -inf
        %1696 = vmax.xlane.f32.xlu0 %v1695
        %v1697 = vpop.xlane.xlu0 %1696
        %v1698 = vsub.f32 %v1692, %v1697
        %v1699 = vmul.f32 %v1698, 1.442695
        %v1700 = vpow.pop %v1699
        %v1701 = vsel %vm1116, %v1700, 0.0
        %1702 = vadd.xlane.f32.xlu0 %v1701
        %v1703 = vpop.xlane.xlu0 %1702
        %s1704 = scalar_lea.vmem [#allocation3], 16
        %v1705 = vld [vmem:[%s1704] sm:$0xff]
        %v1707 = vsel %vm1116, %v1700, 0
        %1709 = vmatprep.subr.mxu0 0.0
        %1710 = vmatpush1.msra.mxu0 %v1705
        %1711 = vmatprep.subr.mxu0 0.0
        %1712 = vmatpush1.msra.mxu0 0.0
        %1713 = vmatprep.subr.mxu0 0.0
        %1714 = vmatpush1.msra.mxu0 0.0
        %1715 = vmatprep.subr.mxu0 0.0
        %1716 = vmatpush1.msra.mxu0 0.0
        %1717 = vmatprep.subr.mxu0 0.0
        %1718 = vmatpush1.msra.mxu0 0.0
        %1719 = vmatprep.subr.mxu0 0.0
        %1720 = vmatpush1.msra.mxu0 0.0
        %1721 = vmatprep.subr.mxu0 0.0
        %1722 = vmatpush1.msra.mxu0 0.0
        %1723 = vmatprep.subr.mxu0 0.0
        %1724 = vmatpush1.msra.mxu0 0.0
        %1725 = vmatprep.subr.mxu0 0.0
        %1726 = vmatpush1.msra.mxu0 0.0
        %1727 = vmatprep.subr.mxu0 0.0
        %1728 = vmatpush1.msra.mxu0 0.0
        %1729 = vmatprep.subr.mxu0 0.0
        %1730 = vmatpush1.msra.mxu0 0.0
        %1731 = vmatprep.subr.mxu0 0.0
        %1732 = vmatpush1.msra.mxu0 0.0
        %1733 = vmatprep.subr.mxu0 0.0
        %1734 = vmatpush1.msra.mxu0 0.0
        %1735 = vmatprep.subr.mxu0 0.0
        %1736 = vmatpush1.msra.mxu0 0.0
        %1737 = vmatprep.subr.mxu0 0.0
        %1738 = vmatpush1.msra.mxu0 0.0
        %1739 = vmatprep.subr.mxu0 0.0
        %1740 = vmatpush1.msra.mxu0 0.0
        %1741 = vmatprep.subr.mxu0 0.0
        %1742 = vmatpush1.msra.mxu0 0.0
        %1743 = vmatprep.subr.mxu0 0.0
        %1744 = vmatpush1.msra.mxu0 0.0
        %1745 = vmatprep.subr.mxu0 0.0
        %1746 = vmatpush1.msra.mxu0 0.0
        %1747 = vmatprep.subr.mxu0 0.0
        %1748 = vmatpush1.msra.mxu0 0.0
        %1749 = vmatprep.subr.mxu0 0.0
        %1750 = vmatpush1.msra.mxu0 0.0
        %1751 = vmatprep.subr.mxu0 0.0
        %1752 = vmatpush1.msra.mxu0 0.0
        %1753 = vmatprep.subr.mxu0 0.0
        %1754 = vmatpush1.msra.mxu0 0.0
        %1755 = vmatprep.subr.mxu0 0.0
        %1756 = vmatpush1.msra.mxu0 0.0
        %1757 = vmatprep.subr.mxu0 0.0
        %1758 = vmatpush1.msra.mxu0 0.0
        %1759 = vmatprep.subr.mxu0 0.0
        %1760 = vmatpush1.msra.mxu0 0.0
        %1761 = vmatprep.subr.mxu0 0.0
        %1762 = vmatpush1.msra.mxu0 0.0
        %1763 = vmatprep.subr.mxu0 0.0
        %1764 = vmatpush1.msra.mxu0 0.0
        %1765 = vmatprep.subr.mxu0 0.0
        %1766 = vmatpush1.msra.mxu0 0.0
        %1767 = vmatprep.subr.mxu0 0.0
        %1768 = vmatpush1.msra.mxu0 0.0
        %1769 = vmatprep.subr.mxu0 0.0
        %1770 = vmatpush1.msra.mxu0 0.0
        %1771 = vmatprep.subr.mxu0 0.0
        %1772 = vmatpush1.msra.mxu0 0.0
        %1773 = vmatprep.mubr.f32.mxu0 0.0
        %1774 = vmatmul.mubr.f32.gmra.mrb[0].mxu0 %v1707
        %v1775 = vpop.f32.mrb[0].mxu0
        %v1776 = vadd.f32 0.0, %v1775
        %v1777 = vpop.f32.mrb[0].mxu0
        %1778 = vdwg.mxu0
        %v1779 = vrcp.pop %v1703
        %v1780 = vmul.f32 %v1776, %v1779
        %1782 = vrot.lane.b32.xlu0 %v1780, 16
        %v1783 = vpop.permute.xlu0 %1782
        %vm1785 = vcmask 195712
        %1786 = vst.msk [vmem:[#allocation4] sm:$0xff] %vm1785, %v1783
        %s1787 = scalar_lea.vmem %s1, 96
        %v1788 = vld [vmem:[%s1787] sm:$0xff]
        %v1789 = vld [vmem:[%s1787 + $0x8] sm:$0xff]
        %v1790 = vld [vmem:[%s1787 + $0x10] sm:$0xff]
        %v1791 = vld [vmem:[%s1787 + $0x18] sm:$0xff]
        %s1792 = scalar_lea.vmem %s2, 3
        %v1793 = vld [vmem:[%s1792] sm:$0x1]
        %v1795 = vlaneseq
        %v1796 = vshrl.u32 %v1795, 7
        %v1797 = vsub.s32 0, %v1796
        %v1798 = vrot.slane %v1793, %v1797
        %1800 = vmatprep.subr.mxu0 0.0
        %1801 = vmatpush1.msra.mxu0 %v1788
        %1802 = vmatprep.subr.mxu0 0.0
        %1803 = vmatpush1.msra.mxu0 %v1789
        %1804 = vmatprep.subr.mxu0 0.0
        %1805 = vmatpush1.msra.mxu0 %v1790
        %1806 = vmatprep.subr.mxu0 0.0
        %1807 = vmatpush1.msra.mxu0 %v1791
        %1808 = vmatprep.subr.mxu0 0.0
        %1809 = vmatpush1.msra.mxu0 0.0
        %1810 = vmatprep.subr.mxu0 0.0
        %1811 = vmatpush1.msra.mxu0 0.0
        %1812 = vmatprep.subr.mxu0 0.0
        %1813 = vmatpush1.msra.mxu0 0.0
        %1814 = vmatprep.subr.mxu0 0.0
        %1815 = vmatpush1.msra.mxu0 0.0
        %1816 = vmatprep.subr.mxu0 0.0
        %1817 = vmatpush1.msra.mxu0 0.0
        %1818 = vmatprep.subr.mxu0 0.0
        %1819 = vmatpush1.msra.mxu0 0.0
        %1820 = vmatprep.subr.mxu0 0.0
        %1821 = vmatpush1.msra.mxu0 0.0
        %1822 = vmatprep.subr.mxu0 0.0
        %1823 = vmatpush1.msra.mxu0 0.0
        %1824 = vmatprep.subr.mxu0 0.0
        %1825 = vmatpush1.msra.mxu0 0.0
        %1826 = vmatprep.subr.mxu0 0.0
        %1827 = vmatpush1.msra.mxu0 0.0
        %1828 = vmatprep.subr.mxu0 0.0
        %1829 = vmatpush1.msra.mxu0 0.0
        %1830 = vmatprep.subr.mxu0 0.0
        %1831 = vmatpush1.msra.mxu0 0.0
        %1832 = vmatprep.subr.mxu0 0.0
        %1833 = vmatpush1.msra.mxu0 0.0
        %1834 = vmatprep.subr.mxu0 0.0
        %1835 = vmatpush1.msra.mxu0 0.0
        %1836 = vmatprep.subr.mxu0 0.0
        %1837 = vmatpush1.msra.mxu0 0.0
        %1838 = vmatprep.subr.mxu0 0.0
        %1839 = vmatpush1.msra.mxu0 0.0
        %1840 = vmatprep.subr.mxu0 0.0
        %1841 = vmatpush1.msra.mxu0 0.0
        %1842 = vmatprep.subr.mxu0 0.0
        %1843 = vmatpush1.msra.mxu0 0.0
        %1844 = vmatprep.subr.mxu0 0.0
        %1845 = vmatpush1.msra.mxu0 0.0
        %1846 = vmatprep.subr.mxu0 0.0
        %1847 = vmatpush1.msra.mxu0 0.0
        %1848 = vmatprep.subr.mxu0 0.0
        %1849 = vmatpush1.msra.mxu0 0.0
        %1850 = vmatprep.subr.mxu0 0.0
        %1851 = vmatpush1.msra.mxu0 0.0
        %1852 = vmatprep.subr.mxu0 0.0
        %1853 = vmatpush1.msra.mxu0 0.0
        %1854 = vmatprep.subr.mxu0 0.0
        %1855 = vmatpush1.msra.mxu0 0.0
        %1856 = vmatprep.subr.mxu0 0.0
        %1857 = vmatpush1.msra.mxu0 0.0
        %1858 = vmatprep.subr.mxu0 0.0
        %1859 = vmatpush1.msra.mxu0 0.0
        %1860 = vmatprep.subr.mxu0 0.0
        %1861 = vmatpush1.msra.mxu0 0.0
        %1862 = vmatprep.subr.mxu0 0.0
        %1863 = vmatpush1.msra.mxu0 0.0
        %1864 = vmatprep.mubr.f32.mxu0 0.0
        %1865 = vmatmul.mubr.f32.gmra.mrb[0].mxu0 %v1042
        %v1866 = vpop.f32.mrb[0].mxu0
        %v1867 = vadd.f32 %v1798, %v1866
        %v1868 = vpop.f32.mrb[0].mxu0
        %1869 = vdwg.mxu0
        %v1870 = vmul.f32 %v1867, 0.17677669
        %s1871 = scalar_lea.vmem [#allocation2], 24
        %v1872 = vld [vmem:[%s1871] sm:$0xff]
        %v1874 = vsel %vm1116, %v1870, 0
        %v1877 = vsel %vm1116, %v1872, 0
        %1879 = vmatprep.subr.mxu0 0.0
        %1880 = vmatpush1.xpose.msra.mxu0 %v1877
        %1881 = vmatprep.subr.mxu0 0.0
        %1882 = vmatpush1.xpose.msra.mxu0 0.0
        %1883 = vmatprep.subr.mxu0 0.0
        %1884 = vmatpush1.xpose.msra.mxu0 0.0
        %1885 = vmatprep.subr.mxu0 0.0
        %1886 = vmatpush1.xpose.msra.mxu0 0.0
        %1887 = vmatprep.subr.mxu0 0.0
        %1888 = vmatpush1.xpose.msra.mxu0 0.0
        %1889 = vmatprep.subr.mxu0 0.0
        %1890 = vmatpush1.xpose.msra.mxu0 0.0
        %1891 = vmatprep.subr.mxu0 0.0
        %1892 = vmatpush1.xpose.msra.mxu0 0.0
        %1893 = vmatprep.subr.mxu0 0.0
        %1894 = vmatpush1.xpose.msra.mxu0 0.0
        %1895 = vmatprep.subr.mxu0 0.0
        %1896 = vmatpush1.xpose.msra.mxu0 0.0
        %1897 = vmatprep.subr.mxu0 0.0
        %1898 = vmatpush1.xpose.msra.mxu0 0.0
        %1899 = vmatprep.subr.mxu0 0.0
        %1900 = vmatpush1.xpose.msra.mxu0 0.0
        %1901 = vmatprep.subr.mxu0 0.0
        %1902 = vmatpush1.xpose.msra.mxu0 0.0
        %1903 = vmatprep.subr.mxu0 0.0
        %1904 = vmatpush1.xpose.msra.mxu0 0.0
        %1905 = vmatprep.subr.mxu0 0.0
        %1906 = vmatpush1.xpose.msra.mxu0 0.0
        %1907 = vmatprep.subr.mxu0 0.0
        %1908 = vmatpush1.xpose.msra.mxu0 0.0
        %1909 = vmatprep.subr.mxu0 0.0
        %1910 = vmatpush1.xpose.msra.mxu0 0.0
        %1911 = vmatprep.subr.mxu0 0.0
        %1912 = vmatpush1.xpose.msra.mxu0 0.0
        %1913 = vmatprep.subr.mxu0 0.0
        %1914 = vmatpush1.xpose.msra.mxu0 0.0
        %1915 = vmatprep.subr.mxu0 0.0
        %1916 = vmatpush1.xpose.msra.mxu0 0.0
        %1917 = vmatprep.subr.mxu0 0.0
        %1918 = vmatpush1.xpose.msra.mxu0 0.0
        %1919 = vmatprep.subr.mxu0 0.0
        %1920 = vmatpush1.xpose.msra.mxu0 0.0
        %1921 = vmatprep.subr.mxu0 0.0
        %1922 = vmatpush1.xpose.msra.mxu0 0.0
        %1923 = vmatprep.subr.mxu0 0.0
        %1924 = vmatpush1.xpose.msra.mxu0 0.0
        %1925 = vmatprep.subr.mxu0 0.0
        %1926 = vmatpush1.xpose.msra.mxu0 0.0
        %1927 = vmatprep.subr.mxu0 0.0
        %1928 = vmatpush1.xpose.msra.mxu0 0.0
        %1929 = vmatprep.subr.mxu0 0.0
        %1930 = vmatpush1.xpose.msra.mxu0 0.0
        %1931 = vmatprep.subr.mxu0 0.0
        %1932 = vmatpush1.xpose.msra.mxu0 0.0
        %1933 = vmatprep.subr.mxu0 0.0
        %1934 = vmatpush1.xpose.msra.mxu0 0.0
        %1935 = vmatprep.subr.mxu0 0.0
        %1936 = vmatpush1.xpose.msra.mxu0 0.0
        %1937 = vmatprep.subr.mxu0 0.0
        %1938 = vmatpush1.xpose.msra.mxu0 0.0
        %1939 = vmatprep.subr.mxu0 0.0
        %1940 = vmatpush1.xpose.msra.mxu0 0.0
        %1941 = vmatprep.subr.mxu0 0.0
        %1942 = vmatpush1.xpose.msra.mxu0 0.0
        %1943 = vmatprep.mubr.f32.mxu0 0.0
        %1944 = vmatmul.mubr.f32.gmra.mrb[0].mxu0 %v1874
        %v1945 = vpop.f32.mrb[0].mxu0
        %v1946 = vadd.f32 0.0, %v1945
        %v1947 = vpop.f32.mrb[0].mxu0
        %1948 = vdwg.mxu0
        %v1949 = vsel %vm1116, %v1946, -inf
        %1950 = vmax.xlane.f32.xlu0 %v1949
        %v1951 = vpop.xlane.xlu0 %1950
        %v1952 = vsub.f32 %v1946, %v1951
        %v1953 = vmul.f32 %v1952, 1.442695
        %v1954 = vpow.pop %v1953
        %v1955 = vsel %vm1116, %v1954, 0.0
        %1956 = vadd.xlane.f32.xlu0 %v1955
        %v1957 = vpop.xlane.xlu0 %1956
        %s1958 = scalar_lea.vmem [#allocation3], 24
        %v1959 = vld [vmem:[%s1958] sm:$0xff]
        %v1961 = vsel %vm1116, %v1954, 0
        %1963 = vmatprep.subr.mxu0 0.0
        %1964 = vmatpush1.msra.mxu0 %v1959
        %1965 = vmatprep.subr.mxu0 0.0
        %1966 = vmatpush1.msra.mxu0 0.0
        %1967 = vmatprep.subr.mxu0 0.0
        %1968 = vmatpush1.msra.mxu0 0.0
        %1969 = vmatprep.subr.mxu0 0.0
        %1970 = vmatpush1.msra.mxu0 0.0
        %1971 = vmatprep.subr.mxu0 0.0
        %1972 = vmatpush1.msra.mxu0 0.0
        %1973 = vmatprep.subr.mxu0 0.0
        %1974 = vmatpush1.msra.mxu0 0.0
        %1975 = vmatprep.subr.mxu0 0.0
        %1976 = vmatpush1.msra.mxu0 0.0
        %1977 = vmatprep.subr.mxu0 0.0
        %1978 = vmatpush1.msra.mxu0 0.0
        %1979 = vmatprep.subr.mxu0 0.0
        %1980 = vmatpush1.msra.mxu0 0.0
        %1981 = vmatprep.subr.mxu0 0.0
        %1982 = vmatpush1.msra.mxu0 0.0
        %1983 = vmatprep.subr.mxu0 0.0
        %1984 = vmatpush1.msra.mxu0 0.0
        %1985 = vmatprep.subr.mxu0 0.0
        %1986 = vmatpush1.msra.mxu0 0.0
        %1987 = vmatprep.subr.mxu0 0.0
        %1988 = vmatpush1.msra.mxu0 0.0
        %1989 = vmatprep.subr.mxu0 0.0
        %1990 = vmatpush1.msra.mxu0 0.0
        %1991 = vmatprep.subr.mxu0 0.0
        %1992 = vmatpush1.msra.mxu0 0.0
        %1993 = vmatprep.subr.mxu0 0.0
        %1994 = vmatpush1.msra.mxu0 0.0
        %1995 = vmatprep.subr.mxu0 0.0
        %1996 = vmatpush1.msra.mxu0 0.0
        %1997 = vmatprep.subr.mxu0 0.0
        %1998 = vmatpush1.msra.mxu0 0.0
        %1999 = vmatprep.subr.mxu0 0.0
        %2000 = vmatpush1.msra.mxu0 0.0
        %2001 = vmatprep.subr.mxu0 0.0
        %2002 = vmatpush1.msra.mxu0 0.0
        %2003 = vmatprep.subr.mxu0 0.0
        %2004 = vmatpush1.msra.mxu0 0.0
        %2005 = vmatprep.subr.mxu0 0.0
        %2006 = vmatpush1.msra.mxu0 0.0
        %2007 = vmatprep.subr.mxu0 0.0
        %2008 = vmatpush1.msra.mxu0 0.0
        %2009 = vmatprep.subr.mxu0 0.0
        %2010 = vmatpush1.msra.mxu0 0.0
        %2011 = vmatprep.subr.mxu0 0.0
        %2012 = vmatpush1.msra.mxu0 0.0
        %2013 = vmatprep.subr.mxu0 0.0
        %2014 = vmatpush1.msra.mxu0 0.0
        %2015 = vmatprep.subr.mxu0 0.0
        %2016 = vmatpush1.msra.mxu0 0.0
        %2017 = vmatprep.subr.mxu0 0.0
        %2018 = vmatpush1.msra.mxu0 0.0
        %2019 = vmatprep.subr.mxu0 0.0
        %2020 = vmatpush1.msra.mxu0 0.0
        %2021 = vmatprep.subr.mxu0 0.0
        %2022 = vmatpush1.msra.mxu0 0.0
        %2023 = vmatprep.subr.mxu0 0.0
        %2024 = vmatpush1.msra.mxu0 0.0
        %2025 = vmatprep.subr.mxu0 0.0
        %2026 = vmatpush1.msra.mxu0 0.0
        %2027 = vmatprep.mubr.f32.mxu0 0.0
        %2028 = vmatmul.mubr.f32.gmra.mrb[0].mxu0 %v1961
        %v2029 = vpop.f32.mrb[0].mxu0
        %v2030 = vadd.f32 0.0, %v2029
        %v2031 = vpop.f32.mrb[0].mxu0
        %2032 = vdwg.mxu0
        %v2033 = vrcp.pop %v1957
        %v2034 = vmul.f32 %v2030, %v2033
        %2036 = vrot.lane.b32.xlu0 %v2034, 24
        %v2037 = vpop.permute.xlu0 %2036
        %vm2039 = vcmask 261312
        %2040 = vst.msk [vmem:[#allocation4] sm:$0xff] %vm2039, %v2037
        %v2041 = vld [vmem:[#allocation4] sm:$0xff]
        %v2042 = vld [vmem:[%s7] sm:$0xff]
        %v2043 = vld [vmem:[%s7 + $0x8] sm:$0xff]
        %v2044 = vld [vmem:[%s7 + $0x10] sm:$0xff]
        %v2045 = vld [vmem:[%s7 + $0x18] sm:$0xff]
        %v2046 = vld [vmem:[%s8] sm:$0x1]
        %v2048 = vlaneseq
        %v2049 = vshrl.u32 %v2048, 7
        %v2050 = vsub.s32 0, %v2049
        %v2051 = vrot.slane %v2046, %v2050
        %v2054 = vsel %vm1040, %v2041, 0
        %2056 = vmatprep.subr.mxu0 0.0
        %2057 = vmatpush1.msra.mxu0 %v2042
        %2058 = vmatprep.subr.mxu0 0.0
        %2059 = vmatpush1.msra.mxu0 %v2043
        %2060 = vmatprep.subr.mxu0 0.0
        %2061 = vmatpush1.msra.mxu0 %v2044
        %2062 = vmatprep.subr.mxu0 0.0
        %2063 = vmatpush1.msra.mxu0 %v2045
        %2064 = vmatprep.subr.mxu0 0.0
        %2065 = vmatpush1.msra.mxu0 0.0
        %2066 = vmatprep.subr.mxu0 0.0
        %2067 = vmatpush1.msra.mxu0 0.0
        %2068 = vmatprep.subr.mxu0 0.0
        %2069 = vmatpush1.msra.mxu0 0.0
        %2070 = vmatprep.subr.mxu0 0.0
        %2071 = vmatpush1.msra.mxu0 0.0
        %2072 = vmatprep.subr.mxu0 0.0
        %2073 = vmatpush1.msra.mxu0 0.0
        %2074 = vmatprep.subr.mxu0 0.0
        %2075 = vmatpush1.msra.mxu0 0.0
        %2076 = vmatprep.subr.mxu0 0.0
        %2077 = vmatpush1.msra.mxu0 0.0
        %2078 = vmatprep.subr.mxu0 0.0
        %2079 = vmatpush1.msra.mxu0 0.0
        %2080 = vmatprep.subr.mxu0 0.0
        %2081 = vmatpush1.msra.mxu0 0.0
        %2082 = vmatprep.subr.mxu0 0.0
        %2083 = vmatpush1.msra.mxu0 0.0
        %2084 = vmatprep.subr.mxu0 0.0
        %2085 = vmatpush1.msra.mxu0 0.0
        %2086 = vmatprep.subr.mxu0 0.0
        %2087 = vmatpush1.msra.mxu0 0.0
        %2088 = vmatprep.subr.mxu0 0.0
        %2089 = vmatpush1.msra.mxu0 0.0
        %2090 = vmatprep.subr.mxu0 0.0
        %2091 = vmatpush1.msra.mxu0 0.0
        %2092 = vmatprep.subr.mxu0 0.0
        %2093 = vmatpush1.msra.mxu0 0.0
        %2094 = vmatprep.subr.mxu0 0.0
        %2095 = vmatpush1.msra.mxu0 0.0
        %2096 = vmatprep.subr.mxu0 0.0
        %2097 = vmatpush1.msra.mxu0 0.0
        %2098 = vmatprep.subr.mxu0 0.0
        %2099 = vmatpush1.msra.mxu0 0.0
        %2100 = vmatprep.subr.mxu0 0.0
        %2101 = vmatpush1.msra.mxu0 0.0
        %2102 = vmatprep.subr.mxu0 0.0
        %2103 = vmatpush1.msra.mxu0 0.0
        %2104 = vmatprep.subr.mxu0 0.0
        %2105 = vmatpush1.msra.mxu0 0.0
        %2106 = vmatprep.subr.mxu0 0.0
        %2107 = vmatpush1.msra.mxu0 0.0
        %2108 = vmatprep.subr.mxu0 0.0
        %2109 = vmatpush1.msra.mxu0 0.0
        %2110 = vmatprep.subr.mxu0 0.0
        %2111 = vmatpush1.msra.mxu0 0.0
        %2112 = vmatprep.subr.mxu0 0.0
        %2113 = vmatpush1.msra.mxu0 0.0
        %2114 = vmatprep.subr.mxu0 0.0
        %2115 = vmatpush1.msra.mxu0 0.0
        %2116 = vmatprep.subr.mxu0 0.0
        %2117 = vmatpush1.msra.mxu0 0.0
        %2118 = vmatprep.subr.mxu0 0.0
        %2119 = vmatpush1.msra.mxu0 0.0
        %2120 = vmatprep.mubr.f32.mxu0 0.0
        %2121 = vmatmul.mubr.f32.gmra.mrb[0].mxu0 %v2054
        %v2122 = vpop.f32.mrb[0].mxu0
        %v2123 = vadd.f32 %v2051, %v2122
        %v2124 = vpop.f32.mrb[0].mxu0
        %2125 = vdwg.mxu0
        %2126 = vst.msk [vmem:[%s337] sm:$0xff] %vm1040, %v2123
        %s2127 = sand.u32 %s239, 1
        %s2128 = scalar_lea.sflag [#allocation6], %s2127
        %s2129 = sand.u32 %s239, 1
        %s2130 = smul.addr %s2129, 8
        %s2131 = scalar_lea.vmem [#allocation5], %s2130
        // Predicated region
        $region61: #{tpu_custom_call.1} parent=55 // pred_check
          %p2132 = pneg %p249
        $region62: #{tpu_custom_call.1} parent=55 // pred_check_branch
          %2134 = sbr.rel (%p2132) target = $region64
        $region63: #{tpu_custom_call.1} parent=55 // pred_region
          %s2136 = ssub.s32 128, 128
          %2137 = vsyncadd %s2128, %s2136
          %s2138 = sadd.s32 %s28, %s27
          %s2139 = smul.addr %s2138, 128
          %s2140 = scalar_lea.hbm %s9, %s2139
          %s2142 = sshll.u32 %s2131, 4
          %s2143 = int_to_ptr.vmem [resolvable:$true] %s2142
          %2145 = dma.vmem_to_hbm [thread:$0]  %s2143, 128, %s2140, %s2128
        $region64: #{tpu_custom_call.1} parent=55 // pred_fallthru
          _
      $region56: #{tpu_custom_call.1} parent=5 // pred_fallthru
        _
      %p2146 = scmp.le.s32.totalorder 2, %s18
      // Predicated region
      $region65: #{tpu_custom_call.1} parent=5 // pred_check
        %p2147 = pneg %p2146
      $region66: #{tpu_custom_call.1} parent=5 // pred_check_branch
        %2149 = sbr.rel (%p2147) target = $region68
      $region67: #{tpu_custom_call.1} parent=5 // pred_region
        %s2150 = ssub.s32 %s18, 2
        // Predicated region
        $region69: #{tpu_custom_call.1} parent=67 // pred_check
          %p2151 = pneg %p255
        $region70: #{tpu_custom_call.1} parent=67 // pred_check_branch
          %2153 = sbr.rel (%p2151) target = $region72
        $region71: #{tpu_custom_call.1} parent=67 // pred_region
          %s2154 = sand.u32 %s240, 1
          %s2155 = scalar_lea.sflag [#allocation6], %s2154
          %s2156 = sand.u32 %s240, 1
          %s2157 = smul.addr %s2156, 8
          %s2158 = scalar_lea.vmem [#allocation5], %s2157
          %2159 = dma.done %s2155, 128
        $region72: #{tpu_custom_call.1} parent=67 // pred_fallthru
          _
      $region68: #{tpu_custom_call.1} parent=5 // pred_fallthru
        _
    $region6: #{tpu_custom_call.1} parent=1 // loop_footer
      %s22 = sadd.s32 1, %s18
    $region7: #{tpu_custom_call.1} parent=1 // loop_footer_branch
      %17 = sbr.rel target = $region3
    $region8: #{tpu_custom_call.1} parent=1 // loop_exit
      _
    %2160 = vsyncpa [#allocation6], 1
    %s2161 = scalar_lea.sflag [#allocation6], 1
    %2162 = vsyncpa %s2161, 1

</llo_original>
